<compile_context>
chip_gen: v6e
topology: v6e:2x2x1
jax: 0.10.0
libtpu: 0.0.40
codegen_flags: <defaults>
</compile_context>

<pallas_src>
import functools
import math

import jax
import jax.numpy as jnp
from jax import lax
from jax.experimental import pallas as pl
from jax.experimental.pallas import tpu as pltpu


def _conv_layer_kernel(masks_ref, x_ref, w_ref, o_ref, col_ref, *,
                       D, H, W, K, pad, eps, use_instance_norm,
                       num_chunks, group_taps, build_dtype):
    """One grid step == (one batch element, one Cout tile).

    masks_ref : (n_masks, S) int8  precomputed conv-padding boundary masks
    x_ref     : (1, Cin, S)        activation slab, S = D*H*W flattened spatial
    w_ref     : (Ct, R)            weight tile, rows ordered (kd, kh, kw, ci)
                or (K, Ct, K*K*Cin) when kd-chunked
    o_ref     : (1, Ct, S)         output tile (NCDHW order, spatial flattened)
    col_ref   : (chunk_rows, S)    VMEM scratch: im2col chunk
    """
    Cin = x_ref.shape[1]
    S = D * H * W
    Ct = o_ref.shape[1]
    chunk_taps = (K * K * K) // num_chunks

    # Build-phase dtype: compute_dtype (bf16) on v6e/v7x, f32 on v5 and older.
    x = x_ref[0].astype(build_dtype)                      # (Cin, S)
    zero = jnp.zeros((), dtype=build_dtype)

    # Hoisted boundary masks: 6*pad int8->bool conversions per grid step
    # (instead of ~50 compares/ANDs inside the 27-tap loop).
    base = {}
    for ax_i in range(3):
        for delta in range(1, pad + 1):
            r = (ax_i * pad + (delta - 1)) * 2
            base[(ax_i, -delta)] = masks_ref[r:r + 1, :] != 0      # idx >= delta
            base[(ax_i, delta)] = masks_ref[r + 1:r + 2, :] != 0   # idx < dim - delta

    tap_offsets = [(kd - pad, kh - pad, kw - pad)
                   for kd in range(K) for kh in range(K) for kw in range(K)]

    acc = jnp.zeros((Ct, S), dtype=jnp.float32)

    for c in range(num_chunks):
        taps = tap_offsets[c * chunk_taps:(c + 1) * chunk_taps]

        # --- im2col build for this chunk: lane rotations (XLU) + selects (VPU);
        # stores batched into full sublane tiles (unmasked vst). ---
        pend = []
        row0 = 0
        for t, (dd, dh, dw) in enumerate(taps):
            off = (dd * H + dh) * W + dw
            tap = x if off == 0 else pltpu.roll(x, (-off) % S, axis=1)

            m = None
            for ax_i, dlt in ((0, dd), (1, dh), (2, dw)):
                if dlt != 0:
                    bm = base[(ax_i, dlt)]
                    m = bm if m is None else (m & bm)
            if m is not None:
                tap = jnp.where(m, tap, zero)

            pend.append(tap)
            if len(pend) == group_taps or t == len(taps) - 1:
                blk = pend[0] if len(pend) == 1 else jnp.concatenate(pend, axis=0)
                col_ref[row0:row0 + blk.shape[0], :] = blk.astype(col_ref.dtype)
                row0 += blk.shape[0]
                pend = []

        # --- MXU: accumulate this chunk's contribution, f32 accumulation. ---
        w_c = w_ref[...] if num_chunks == 1 else w_ref[c]
        acc = acc + jnp.dot(w_c, col_ref[...], preferred_element_type=jnp.float32)

    if use_instance_norm:
        # Fused single-pass stats (biased variance, eps inside rsqrt), matching
        # PyTorch InstanceNorm3d defaults (affine=False, no running stats).
        inv_n = jnp.float32(1.0 / S)
        mean = jnp.sum(acc, axis=1, keepdims=True) * inv_n          # (Ct, 1)
        ex2 = jnp.sum(acc * acc, axis=1, keepdims=True) * inv_n     # (Ct, 1)
        var = jnp.maximum(ex2 - mean * mean, 0.0)
        acc = (acc - mean) * lax.rsqrt(var + eps)

    acc = jnp.maximum(acc, 0.0)          # ReLU
    # Dropout: identity at inference.
    o_ref[0] = acc.astype(o_ref.dtype)


def _tpu_vmem_capacity_bytes():
    try:
        return int(pltpu.get_tpu_info().vmem_capacity_bytes)
    except Exception:
        return 64 << 20   # conservative fallback (v7x per-TensorCore)


def _needs_f32_build(compute_dtype):
    """v5 and older have no bf16 VPU path; keep the roll/mask phase in f32 there."""
    if jnp.dtype(compute_dtype).itemsize == 4:
        return False
    try:
        kind = jax.devices()[0].device_kind.lower()
    except Exception:
        return False
    return any(v in kind for v in ("v2", "v3", "v4", "v5"))


def conv_layer_forward(x_ncdhw, weight_oidhw, *, eps=1e-5, use_instance_norm=True,
                       padding=1, compute_dtype=jnp.bfloat16, cout_tile=None,
                       chunk_im2col=None):
    """ConvLayer forward.

    x_ncdhw      : (N, Cin, D, H, W)     PyTorch NCDHW layout
    weight_oidhw : (Cout, Cin, K, K, K)  PyTorch Conv3d weight (bias=False)
    returns      : (N, Cout, D, H, W)    same dtype as x
    """
    N, Cin, D, H, W = x_ncdhw.shape
    Cout, Cin_w, K = weight_oidhw.shape[:3]
    assert Cin_w == Cin
    assert K == 2 * padding + 1, "shape-preserving conv expected (e.g. k=3, pad=1)"
    S = D * H * W
    KK = K * K
    R = K * KK * Cin
    out_dtype = x_ncdhw.dtype
    compute_dtype = jnp.dtype(compute_dtype)
    citem = compute_dtype.itemsize
    oitem = jnp.dtype(out_dtype).itemsize

    # --- Cout tiling: respect sublane packing for the lhs dtype; target <=256
    # MXU rows (v6e/v7x) when Cout is large. ---
    sub = 8 if citem == 4 else (16 if citem == 2 else 32)
    if cout_tile is None:
        cout_tile = Cout
        if Cout > 256:
            for cand in range(256, 0, -1):
                if Cout % cand == 0 and cand % sub == 0:
                    cout_tile = cand
                    break
    assert Cout % cout_tile == 0
    assert cout_tile == Cout or cout_tile % sub == 0
    G = Cout // cout_tile

    # --- im2col chunking: per-kd-plane chunks once the full (R, S) scratch
    # gets large (v7x VMEM); single matmul for small problems. ---
    if chunk_im2col is None:
        chunk_im2col = (R * S * citem) > (16 << 20)
    num_chunks = K if chunk_im2col else 1
    chunk_taps = (K * KK) // num_chunks
    chunk_rows = chunk_taps * Cin

    # --- group taps so each im2col store is a full sublane tile of col_ref. ---
    group_taps = max(1, min(sub // math.gcd(Cin, sub), chunk_taps))

    build_dtype = jnp.float32 if _needs_f32_build(compute_dtype) else compute_dtype

    # Free reshape only (no transpose, no spatial pad): NCDHW -> (N, Cin, S).
    x_flat = x_ncdhw.reshape(N, Cin, S).astype(compute_dtype)

    # Weights: (Cout, Cin, kd, kh, kw) -> rows ordered (kd, kh, kw, ci).  Tiny.
    w_perm = jnp.transpose(weight_oidhw, (0, 2, 3, 4, 1)).astype(compute_dtype)
    if num_chunks == 1:
        w_mat = w_perm.reshape(Cout, R)
        w_spec = pl.BlockSpec((cout_tile, R), lambda n, g: (g, 0))
    else:
        # (Cout, K, KK*Cin) -> (K, Cout, KK*Cin): per-kd-plane weight slabs so
        # the kernel indexes the leading dim (no unaligned lane slicing).
        w_mat = jnp.transpose(w_perm.reshape(Cout, K, KK * Cin), (1, 0, 2))
        w_spec = pl.BlockSpec((K, cout_tile, KK * Cin), lambda n, g: (0, g, 0))

    # Precomputed conv-padding boundary masks, int8 (2*3*pad, S): replaces the
    # int32 coords stream and all per-tap compares.
    s = jnp.arange(S, dtype=jnp.int32)
    d_idx, h_idx, w_idx = s // (H * W), (s // W) % H, s % W
    rows = []
    for idx, dim in ((d_idx, D), (h_idx, H), (w_idx, W)):
        for delta in range(1, padding + 1):
            rows.append(idx >= delta)        # valid for taps shifted by -delta
            rows.append(idx < dim - delta)   # valid for taps shifted by +delta
    if rows:
        masks = jnp.stack(rows, axis=0).astype(jnp.int8)
    else:  # K == 1 (no padding): dummy row, never read.
        masks = jnp.zeros((1, S), jnp.int8)
    n_masks = masks.shape[0]

    kernel = functools.partial(
        _conv_layer_kernel, D=D, H=H, W=W, K=K, pad=padding, eps=float(eps),
        use_instance_norm=use_instance_norm, num_chunks=num_chunks,
        group_taps=group_taps, build_dtype=build_dtype)

    # Explicit VMEM budget, capped to this chip's capacity minus headroom.
    vmem_need = (2 * n_masks * S                     # int8 mask block (x2 buf)
                 + 2 * Cin * S * citem               # x block
                 + 2 * cout_tile * R * citem         # weight tile
                 + 2 * cout_tile * S * oitem         # output block
                 + chunk_rows * S * citem            # im2col scratch
                 + cout_tile * S * 4                 # f32 accumulator
                 + (4 << 20))                        # internal-scratch headroom
    vmem_cap = _tpu_vmem_capacity_bytes() - (8 << 20)
    vmem_bytes = int(max(min(max(vmem_need, 32 << 20), vmem_cap), 16 << 20))

    cost = pl.CostEstimate(
        flops=2 * N * Cout * R * S,
        transcendentals=(N * Cout) if use_instance_norm else 0,
        bytes_accessed=int(x_flat.size * citem + w_mat.size * citem
                           + masks.size + N * Cout * S * oitem))

    out = pl.pallas_call(
        kernel,
        out_shape=jax.ShapeDtypeStruct((N, Cout, S), out_dtype),
        grid_spec=pltpu.PrefetchScalarGridSpec(
            num_scalar_prefetch=0,
            grid=(N, G),
            in_specs=[
                pl.BlockSpec((n_masks, S), lambda n, g: (0, 0)),
                pl.BlockSpec((1, Cin, S), lambda n, g: (n, 0, 0)),
                w_spec,
            ],
            out_specs=pl.BlockSpec((1, cout_tile, S), lambda n, g: (n, g, 0)),
            scratch_shapes=[pltpu.VMEM((chunk_rows, S), compute_dtype)],
        ),
        compiler_params=pltpu.CompilerParams(
            dimension_semantics=("parallel", "parallel"),
            vmem_limit_bytes=vmem_bytes),
        cost_estimate=cost,
    )(masks, x_flat, w_mat)

    # Free reshape back to NCDHW.
    return out.reshape(N, Cout, D, H, W)


def _reference_forward(x_ncdhw, weight_oidhw, *, eps, use_instance_norm, padding=1):
    """Pure-JAX reference (XLA conv) for correctness checking."""
    y = lax.conv_general_dilated(
        x_ncdhw.astype(jnp.float32), weight_oidhw.astype(jnp.float32),
        window_strides=(1, 1, 1), padding=[(padding, padding)] * 3,
        dimension_numbers=("NCDHW", "OIDHW", "NCDHW"),
        precision=lax.Precision.HIGHEST)
    if use_instance_norm:
        mean = jnp.mean(y, axis=(2, 3, 4), keepdims=True)
        var = jnp.mean((y - mean) ** 2, axis=(2, 3, 4), keepdims=True)
        y = (y - mean) * lax.rsqrt(var + eps)
    return jnp.maximum(y, 0.0)


if __name__ == "__main__":
    # ConvLayer-consistent small shapes: batch=2, in_channels=4, out_channels=8,
    # cubic volume 8x8x8 (S = 512 lanes), kernel_size=3, padding=1.
    N, Cin, Cout, D, H, W, K = 2, 4, 8, 8, 8, 8, 3
    eps = 1e-5

    key = jax.random.PRNGKey(0)
    kx, kw = jax.random.split(key)
    x = jax.random.normal(kx, (N, Cin, D, H, W), dtype=jnp.float32)
    weight = jax.random.normal(kw, (Cout, Cin, K, K, K), dtype=jnp.float32) * 0.1

    ref = _reference_forward(x, weight, eps=eps, use_instance_norm=True)

    # 1) f32 matmul path, single-matmul im2col: tight check.
    out_f32 = conv_layer_forward(x, weight, eps=eps, use_instance_norm=True,
                                 compute_dtype=jnp.float32)
    out_f32 = jax.block_until_ready(out_f32)
    assert out_f32.shape == (N, Cout, D, H, W), out_f32.shape
    err_f32 = float(jnp.max(jnp.abs(out_f32 - ref)))
    assert err_f32 < 1e-3, err_f32

    # 2) kd-chunked im2col path (3 matmul-accumulate steps): tight check.
    out_chunk = conv_layer_forward(x, weight, eps=eps, use_instance_norm=True,
                                   compute_dtype=jnp.float32, chunk_im2col=True)
    out_chunk = jax.block_until_ready(out_chunk)
    err_chunk = float(jnp.max(jnp.abs(out_chunk - ref)))
    assert err_chunk < 1e-3, err_chunk

    # 3) bf16 matmul operands (f32 MXU accumulation + f32 norm math): the conv
    #    input/im2col are bf16-quantized, so the check is intentionally loose.
    out_bf16 = conv_layer_forward(x, weight, eps=eps, use_instance_norm=True,
                                  compute_dtype=jnp.bfloat16)
    out_bf16 = jax.block_until_ready(out_bf16)
    err_bf16 = float(jnp.max(jnp.abs(out_bf16 - ref)))
    assert err_bf16 < 1e-1, err_bf16

    print("KERNEL_OK")
</pallas_src>

<mosaic_0001>
module attributes {stable_mosaic.version = 11 : i64} {
  func.func @_conv_layer_kernel(%arg0: i32, %arg1: i32, %arg2: memref<6x512xi8, #tpu.memory_space<vmem>>, %arg3: memref<1x4x512xf32, #tpu.memory_space<vmem>>, %arg4: memref<8x108xf32, #tpu.memory_space<vmem>>, %arg5: memref<1x8x512xf32, #tpu.memory_space<vmem>>, %arg6: memref<108x512xf32, #tpu.memory_space<vmem>>) attributes {dimension_semantics = [#tpu.dimension_semantics<parallel>, #tpu.dimension_semantics<parallel>], iteration_bounds = array<i64: 2, 1>, scalar_prefetch = 0 : i64, scratch_operands = 1 : i64, tpu.core_type = #tpu.core_type<tc>, window_params = [{pipeline_mode = #tpu.pipeline_mode<synchronous>, transform_indices = @transform_0, window_bounds = array<i64: 6, 512>}, {transform_indices = @transform_1, window_bounds = array<i64: 1, 4, 512>}, {transform_indices = @transform_2, window_bounds = array<i64: 8, 108>}, {transform_indices = @transform_3, window_bounds = array<i64: 1, 8, 512>}]} {
    %c0 = arith.constant 0 : index
    %c0_0 = arith.constant 0 : index
    %c0_1 = arith.constant 0 : index
    %0 = vector.load %arg3[%c0, %c0_0, %c0_1] : memref<1x4x512xf32, #tpu.memory_space<vmem>>, vector<1x4x512xf32>
    %1 = vector.shape_cast %0 : vector<1x4x512xf32> to vector<4x512xf32>
    %c0_2 = arith.constant 0 : index
    %c0_3 = arith.constant 0 : index
    %2 = vector.load %arg2[%c0_2, %c0_3] : memref<6x512xi8, #tpu.memory_space<vmem>>, vector<1x512xi8>
    %c0_i8 = arith.constant 0 : i8
    %3 = vector.broadcast %c0_i8 : i8 to vector<1x512xi8>
    %4 = arith.cmpi ne, %2, %3 : vector<1x512xi8>
    %c1 = arith.constant 1 : index
    %c0_4 = arith.constant 0 : index
    %5 = vector.load %arg2[%c1, %c0_4] : memref<6x512xi8, #tpu.memory_space<vmem>>, vector<1x512xi8>
    %c0_i8_5 = arith.constant 0 : i8
    %6 = vector.broadcast %c0_i8_5 : i8 to vector<1x512xi8>
    %7 = arith.cmpi ne, %5, %6 : vector<1x512xi8>
    %c2 = arith.constant 2 : index
    %c0_6 = arith.constant 0 : index
    %8 = vector.load %arg2[%c2, %c0_6] : memref<6x512xi8, #tpu.memory_space<vmem>>, vector<1x512xi8>
    %c0_i8_7 = arith.constant 0 : i8
    %9 = vector.broadcast %c0_i8_7 : i8 to vector<1x512xi8>
    %10 = arith.cmpi ne, %8, %9 : vector<1x512xi8>
    %c3 = arith.constant 3 : index
    %c0_8 = arith.constant 0 : index
    %11 = vector.load %arg2[%c3, %c0_8] : memref<6x512xi8, #tpu.memory_space<vmem>>, vector<1x512xi8>
    %c0_i8_9 = arith.constant 0 : i8
    %12 = vector.broadcast %c0_i8_9 : i8 to vector<1x512xi8>
    %13 = arith.cmpi ne, %11, %12 : vector<1x512xi8>
    %c4 = arith.constant 4 : index
    %c0_10 = arith.constant 0 : index
    %14 = vector.load %arg2[%c4, %c0_10] : memref<6x512xi8, #tpu.memory_space<vmem>>, vector<1x512xi8>
    %c0_i8_11 = arith.constant 0 : i8
    %15 = vector.broadcast %c0_i8_11 : i8 to vector<1x512xi8>
    %16 = arith.cmpi ne, %14, %15 : vector<1x512xi8>
    %c5 = arith.constant 5 : index
    %c0_12 = arith.constant 0 : index
    %17 = vector.load %arg2[%c5, %c0_12] : memref<6x512xi8, #tpu.memory_space<vmem>>, vector<1x512xi8>
    %c0_i8_13 = arith.constant 0 : i8
    %18 = vector.broadcast %c0_i8_13 : i8 to vector<1x512xi8>
    %19 = arith.cmpi ne, %17, %18 : vector<1x512xi8>
    %cst = arith.constant 0.000000e+00 : f32
    %20 = vector.broadcast %cst : f32 to vector<8x512xf32>
    %c73_i32 = arith.constant 73 : i32
    %21 = tpu.dynamic_rotate %1 by %c73_i32 dim 1 : vector<4x512xf32>, i32 -> vector<4x512xf32>
    %22 = arith.andi %4, %10 : vector<1x512xi1>
    %23 = arith.andi %22, %16 : vector<1x512xi1>
    %cst_14 = arith.constant 0.000000e+00 : f32
    %24 = vector.shape_cast %23 : vector<1x512xi1> to vector<1x512xi1>
    %25 = vector.broadcast %24 : vector<1x512xi1> to vector<4x512xi1>
    %26 = vector.broadcast %cst_14 : f32 to vector<4x512xf32>
    %27 = arith.select %25, %21, %26 : vector<4x512xi1>, vector<4x512xf32>
    %c72_i32 = arith.constant 72 : i32
    %28 = tpu.dynamic_rotate %1 by %c72_i32 dim 1 : vector<4x512xf32>, i32 -> vector<4x512xf32>
    %29 = arith.andi %4, %10 : vector<1x512xi1>
    %cst_15 = arith.constant 0.000000e+00 : f32
    %30 = vector.shape_cast %29 : vector<1x512xi1> to vector<1x512xi1>
    %31 = vector.broadcast %30 : vector<1x512xi1> to vector<4x512xi1>
    %32 = vector.broadcast %cst_15 : f32 to vector<4x512xf32>
    %33 = arith.select %31, %28, %32 : vector<4x512xi1>, vector<4x512xf32>
    %34 = tpu.concatenate %27, %33 in 0 : vector<4x512xf32>, vector<4x512xf32> -> vector<8x512xf32>
    %c0_16 = arith.constant 0 : index
    %c0_17 = arith.constant 0 : index
    %35 = vector.load %arg6[%c0_16, %c0_17] : memref<108x512xf32, #tpu.memory_space<vmem>>, vector<8x512xf32>
    tpu.vector_store %arg6[%c0_16, %c0_17], %34 {strides = array<i32>} : memref<108x512xf32, #tpu.memory_space<vmem>>, vector<8x512xf32>,
    %c71_i32 = arith.constant 71 : i32
    %36 = tpu.dynamic_rotate %1 by %c71_i32 dim 1 : vector<4x512xf32>, i32 -> vector<4x512xf32>
    %37 = arith.andi %4, %10 : vector<1x512xi1>
    %38 = arith.andi %37, %19 : vector<1x512xi1>
    %cst_18 = arith.constant 0.000000e+00 : f32
    %39 = vector.shape_cast %38 : vector<1x512xi1> to vector<1x512xi1>
    %40 = vector.broadcast %39 : vector<1x512xi1> to vector<4x512xi1>
    %41 = vector.broadcast %cst_18 : f32 to vector<4x512xf32>
    %42 = arith.select %40, %36, %41 : vector<4x512xi1>, vector<4x512xf32>
    %c65_i32 = arith.constant 65 : i32
    %43 = tpu.dynamic_rotate %1 by %c65_i32 dim 1 : vector<4x512xf32>, i32 -> vector<4x512xf32>
    %44 = arith.andi %4, %16 : vector<1x512xi1>
    %cst_19 = arith.constant 0.000000e+00 : f32
    %45 = vector.shape_cast %44 : vector<1x512xi1> to vector<1x512xi1>
    %46 = vector.broadcast %45 : vector<1x512xi1> to vector<4x512xi1>
    %47 = vector.broadcast %cst_19 : f32 to vector<4x512xf32>
    %48 = arith.select %46, %43, %47 : vector<4x512xi1>, vector<4x512xf32>
    %49 = tpu.concatenate %42, %48 in 0 : vector<4x512xf32>, vector<4x512xf32> -> vector<8x512xf32>
    %c8 = arith.constant 8 : index
    %c0_20 = arith.constant 0 : index
    %50 = vector.load %arg6[%c8, %c0_20] : memref<108x512xf32, #tpu.memory_space<vmem>>, vector<8x512xf32>
    tpu.vector_store %arg6[%c8, %c0_20], %49 {strides = array<i32>} : memref<108x512xf32, #tpu.memory_space<vmem>>, vector<8x512xf32>,
    %c64_i32 = arith.constant 64 : i32
    %51 = tpu.dynamic_rotate %1 by %c64_i32 dim 1 : vector<4x512xf32>, i32 -> vector<4x512xf32>
    %cst_21 = arith.constant 0.000000e+00 : f32
    %52 = vector.shape_cast %4 : vector<1x512xi1> to vector<1x512xi1>
    %53 = vector.broadcast %52 : vector<1x512xi1> to vector<4x512xi1>
    %54 = vector.broadcast %cst_21 : f32 to vector<4x512xf32>
    %55 = arith.select %53, %51, %54 : vector<4x512xi1>, vector<4x512xf32>
    %c63_i32 = arith.constant 63 : i32
    %56 = tpu.dynamic_rotate %1 by %c63_i32 dim 1 : vector<4x512xf32>, i32 -> vector<4x512xf32>
    %57 = arith.andi %4, %19 : vector<1x512xi1>
    %cst_22 = arith.constant 0.000000e+00 : f32
    %58 = vector.shape_cast %57 : vector<1x512xi1> to vector<1x512xi1>
    %59 = vector.broadcast %58 : vector<1x512xi1> to vector<4x512xi1>
    %60 = vector.broadcast %cst_22 : f32 to vector<4x512xf32>
    %61 = arith.select %59, %56, %60 : vector<4x512xi1>, vector<4x512xf32>
    %62 = tpu.concatenate %55, %61 in 0 : vector<4x512xf32>, vector<4x512xf32> -> vector<8x512xf32>
    %c16 = arith.constant 16 : index
    %c0_23 = arith.constant 0 : index
    %63 = vector.load %arg6[%c16, %c0_23] : memref<108x512xf32, #tpu.memory_space<vmem>>, vector<8x512xf32>
    tpu.vector_store %arg6[%c16, %c0_23], %62 {strides = array<i32>} : memref<108x512xf32, #tpu.memory_space<vmem>>, vector<8x512xf32>,
    %c57_i32 = arith.constant 57 : i32
    %64 = tpu.dynamic_rotate %1 by %c57_i32 dim 1 : vector<4x512xf32>, i32 -> vector<4x512xf32>
    %65 = arith.andi %4, %13 : vector<1x512xi1>
    %66 = arith.andi %65, %16 : vector<1x512xi1>
    %cst_24 = arith.constant 0.000000e+00 : f32
    %67 = vector.shape_cast %66 : vector<1x512xi1> to vector<1x512xi1>
    %68 = vector.broadcast %67 : vector<1x512xi1> to vector<4x512xi1>
    %69 = vector.broadcast %cst_24 : f32 to vector<4x512xf32>
    %70 = arith.select %68, %64, %69 : vector<4x512xi1>, vector<4x512xf32>
    %c56_i32 = arith.constant 56 : i32
    %71 = tpu.dynamic_rotate %1 by %c56_i32 dim 1 : vector<4x512xf32>, i32 -> vector<4x512xf32>
    %72 = arith.andi %4, %13 : vector<1x512xi1>
    %cst_25 = arith.constant 0.000000e+00 : f32
    %73 = vector.shape_cast %72 : vector<1x512xi1> to vector<1x512xi1>
    %74 = vector.broadcast %73 : vector<1x512xi1> to vector<4x512xi1>
    %75 = vector.broadcast %cst_25 : f32 to vector<4x512xf32>
    %76 = arith.select %74, %71, %75 : vector<4x512xi1>, vector<4x512xf32>
    %77 = tpu.concatenate %70, %76 in 0 : vector<4x512xf32>, vector<4x512xf32> -> vector<8x512xf32>
    %c24 = arith.constant 24 : index
    %c0_26 = arith.constant 0 : index
    %78 = vector.load %arg6[%c24, %c0_26] : memref<108x512xf32, #tpu.memory_space<vmem>>, vector<8x512xf32>
    tpu.vector_store %arg6[%c24, %c0_26], %77 {strides = array<i32>} : memref<108x512xf32, #tpu.memory_space<vmem>>, vector<8x512xf32>,
    %c55_i32 = arith.constant 55 : i32
    %79 = tpu.dynamic_rotate %1 by %c55_i32 dim 1 : vector<4x512xf32>, i32 -> vector<4x512xf32>
    %80 = arith.andi %4, %13 : vector<1x512xi1>
    %81 = arith.andi %80, %19 : vector<1x512xi1>
    %cst_27 = arith.constant 0.000000e+00 : f32
    %82 = vector.shape_cast %81 : vector<1x512xi1> to vector<1x512xi1>
    %83 = vector.broadcast %82 : vector<1x512xi1> to vector<4x512xi1>
    %84 = vector.broadcast %cst_27 : f32 to vector<4x512xf32>
    %85 = arith.select %83, %79, %84 : vector<4x512xi1>, vector<4x512xf32>
    %c9_i32 = arith.constant 9 : i32
    %86 = tpu.dynamic_rotate %1 by %c9_i32 dim 1 : vector<4x512xf32>, i32 -> vector<4x512xf32>
    %87 = arith.andi %10, %16 : vector<1x512xi1>
    %cst_28 = arith.constant 0.000000e+00 : f32
    %88 = vector.shape_cast %87 : vector<1x512xi1> to vector<1x512xi1>
    %89 = vector.broadcast %88 : vector<1x512xi1> to vector<4x512xi1>
    %90 = vector.broadcast %cst_28 : f32 to vector<4x512xf32>
    %91 = arith.select %89, %86, %90 : vector<4x512xi1>, vector<4x512xf32>
    %92 = tpu.concatenate %85, %91 in 0 : vector<4x512xf32>, vector<4x512xf32> -> vector<8x512xf32>
    %c32 = arith.constant 32 : index
    %c0_29 = arith.constant 0 : index
    %93 = vector.load %arg6[%c32, %c0_29] : memref<108x512xf32, #tpu.memory_space<vmem>>, vector<8x512xf32>
    tpu.vector_store %arg6[%c32, %c0_29], %92 {strides = array<i32>} : memref<108x512xf32, #tpu.memory_space<vmem>>, vector<8x512xf32>,
    %c8_i32 = arith.constant 8 : i32
    %94 = tpu.dynamic_rotate %1 by %c8_i32 dim 1 : vector<4x512xf32>, i32 -> vector<4x512xf32>
    %cst_30 = arith.constant 0.000000e+00 : f32
    %95 = vector.shape_cast %10 : vector<1x512xi1> to vector<1x512xi1>
    %96 = vector.broadcast %95 : vector<1x512xi1> to vector<4x512xi1>
    %97 = vector.broadcast %cst_30 : f32 to vector<4x512xf32>
    %98 = arith.select %96, %94, %97 : vector<4x512xi1>, vector<4x512xf32>
    %c7_i32 = arith.constant 7 : i32
    %99 = tpu.dynamic_rotate %1 by %c7_i32 dim 1 : vector<4x512xf32>, i32 -> vector<4x512xf32>
    %100 = arith.andi %10, %19 : vector<1x512xi1>
    %cst_31 = arith.constant 0.000000e+00 : f32
    %101 = vector.shape_cast %100 : vector<1x512xi1> to vector<1x512xi1>
    %102 = vector.broadcast %101 : vector<1x512xi1> to vector<4x512xi1>
    %103 = vector.broadcast %cst_31 : f32 to vector<4x512xf32>
    %104 = arith.select %102, %99, %103 : vector<4x512xi1>, vector<4x512xf32>
    %105 = tpu.concatenate %98, %104 in 0 : vector<4x512xf32>, vector<4x512xf32> -> vector<8x512xf32>
    %c40 = arith.constant 40 : index
    %c0_32 = arith.constant 0 : index
    %106 = vector.load %arg6[%c40, %c0_32] : memref<108x512xf32, #tpu.memory_space<vmem>>, vector<8x512xf32>
    tpu.vector_store %arg6[%c40, %c0_32], %105 {strides = array<i32>} : memref<108x512xf32, #tpu.memory_space<vmem>>, vector<8x512xf32>,
    %c1_i32 = arith.constant 1 : i32
    %107 = tpu.dynamic_rotate %1 by %c1_i32 dim 1 : vector<4x512xf32>, i32 -> vector<4x512xf32>
    %cst_33 = arith.constant 0.000000e+00 : f32
    %108 = vector.shape_cast %16 : vector<1x512xi1> to vector<1x512xi1>
    %109 = vector.broadcast %108 : vector<1x512xi1> to vector<4x512xi1>
    %110 = vector.broadcast %cst_33 : f32 to vector<4x512xf32>
    %111 = arith.select %109, %107, %110 : vector<4x512xi1>, vector<4x512xf32>
    %112 = tpu.concatenate %111, %1 in 0 : vector<4x512xf32>, vector<4x512xf32> -> vector<8x512xf32>
    %c48 = arith.constant 48 : index
    %c0_34 = arith.constant 0 : index
    %113 = vector.load %arg6[%c48, %c0_34] : memref<108x512xf32, #tpu.memory_space<vmem>>, vector<8x512xf32>
    tpu.vector_store %arg6[%c48, %c0_34], %112 {strides = array<i32>} : memref<108x512xf32, #tpu.memory_space<vmem>>, vector<8x512xf32>,
    %c511_i32 = arith.constant 511 : i32
    %114 = tpu.dynamic_rotate %1 by %c511_i32 dim 1 : vector<4x512xf32>, i32 -> vector<4x512xf32>
    %cst_35 = arith.constant 0.000000e+00 : f32
    %115 = vector.shape_cast %19 : vector<1x512xi1> to vector<1x512xi1>
    %116 = vector.broadcast %115 : vector<1x512xi1> to vector<4x512xi1>
    %117 = vector.broadcast %cst_35 : f32 to vector<4x512xf32>
    %118 = arith.select %116, %114, %117 : vector<4x512xi1>, vector<4x512xf32>
    %c505_i32 = arith.constant 505 : i32
    %119 = tpu.dynamic_rotate %1 by %c505_i32 dim 1 : vector<4x512xf32>, i32 -> vector<4x512xf32>
    %120 = arith.andi %13, %16 : vector<1x512xi1>
    %cst_36 = arith.constant 0.000000e+00 : f32
    %121 = vector.shape_cast %120 : vector<1x512xi1> to vector<1x512xi1>
    %122 = vector.broadcast %121 : vector<1x512xi1> to vector<4x512xi1>
    %123 = vector.broadcast %cst_36 : f32 to vector<4x512xf32>
    %124 = arith.select %122, %119, %123 : vector<4x512xi1>, vector<4x512xf32>
    %125 = tpu.concatenate %118, %124 in 0 : vector<4x512xf32>, vector<4x512xf32> -> vector<8x512xf32>
    %c56 = arith.constant 56 : index
    %c0_37 = arith.constant 0 : index
    %126 = vector.load %arg6[%c56, %c0_37] : memref<108x512xf32, #tpu.memory_space<vmem>>, vector<8x512xf32>
    tpu.vector_store %arg6[%c56, %c0_37], %125 {strides = array<i32>} : memref<108x512xf32, #tpu.memory_space<vmem>>, vector<8x512xf32>,
    %c504_i32 = arith.constant 504 : i32
    %127 = tpu.dynamic_rotate %1 by %c504_i32 dim 1 : vector<4x512xf32>, i32 -> vector<4x512xf32>
    %cst_38 = arith.constant 0.000000e+00 : f32
    %128 = vector.shape_cast %13 : vector<1x512xi1> to vector<1x512xi1>
    %129 = vector.broadcast %128 : vector<1x512xi1> to vector<4x512xi1>
    %130 = vector.broadcast %cst_38 : f32 to vector<4x512xf32>
    %131 = arith.select %129, %127, %130 : vector<4x512xi1>, vector<4x512xf32>
    %c503_i32 = arith.constant 503 : i32
    %132 = tpu.dynamic_rotate %1 by %c503_i32 dim 1 : vector<4x512xf32>, i32 -> vector<4x512xf32>
    %133 = arith.andi %13, %19 : vector<1x512xi1>
    %cst_39 = arith.constant 0.000000e+00 : f32
    %134 = vector.shape_cast %133 : vector<1x512xi1> to vector<1x512xi1>
    %135 = vector.broadcast %134 : vector<1x512xi1> to vector<4x512xi1>
    %136 = vector.broadcast %cst_39 : f32 to vector<4x512xf32>
    %137 = arith.select %135, %132, %136 : vector<4x512xi1>, vector<4x512xf32>
    %138 = tpu.concatenate %131, %137 in 0 : vector<4x512xf32>, vector<4x512xf32> -> vector<8x512xf32>
    %c64 = arith.constant 64 : index
    %c0_40 = arith.constant 0 : index
    %139 = vector.load %arg6[%c64, %c0_40] : memref<108x512xf32, #tpu.memory_space<vmem>>, vector<8x512xf32>
    tpu.vector_store %arg6[%c64, %c0_40], %138 {strides = array<i32>} : memref<108x512xf32, #tpu.memory_space<vmem>>, vector<8x512xf32>,
    %c457_i32 = arith.constant 457 : i32
    %140 = tpu.dynamic_rotate %1 by %c457_i32 dim 1 : vector<4x512xf32>, i32 -> vector<4x512xf32>
    %141 = arith.andi %7, %10 : vector<1x512xi1>
    %142 = arith.andi %141, %16 : vector<1x512xi1>
    %cst_41 = arith.constant 0.000000e+00 : f32
    %143 = vector.shape_cast %142 : vector<1x512xi1> to vector<1x512xi1>
    %144 = vector.broadcast %143 : vector<1x512xi1> to vector<4x512xi1>
    %145 = vector.broadcast %cst_41 : f32 to vector<4x512xf32>
    %146 = arith.select %144, %140, %145 : vector<4x512xi1>, vector<4x512xf32>
    %c456_i32 = arith.constant 456 : i32
    %147 = tpu.dynamic_rotate %1 by %c456_i32 dim 1 : vector<4x512xf32>, i32 -> vector<4x512xf32>
    %148 = arith.andi %7, %10 : vector<1x512xi1>
    %cst_42 = arith.constant 0.000000e+00 : f32
    %149 = vector.shape_cast %148 : vector<1x512xi1> to vector<1x512xi1>
    %150 = vector.broadcast %149 : vector<1x512xi1> to vector<4x512xi1>
    %151 = vector.broadcast %cst_42 : f32 to vector<4x512xf32>
    %152 = arith.select %150, %147, %151 : vector<4x512xi1>, vector<4x512xf32>
    %153 = tpu.concatenate %146, %152 in 0 : vector<4x512xf32>, vector<4x512xf32> -> vector<8x512xf32>
    %c72 = arith.constant 72 : index
    %c0_43 = arith.constant 0 : index
    %154 = vector.load %arg6[%c72, %c0_43] : memref<108x512xf32, #tpu.memory_space<vmem>>, vector<8x512xf32>
    tpu.vector_store %arg6[%c72, %c0_43], %153 {strides = array<i32>} : memref<108x512xf32, #tpu.memory_space<vmem>>, vector<8x512xf32>,
    %c455_i32 = arith.constant 455 : i32
    %155 = tpu.dynamic_rotate %1 by %c455_i32 dim 1 : vector<4x512xf32>, i32 -> vector<4x512xf32>
    %156 = arith.andi %7, %10 : vector<1x512xi1>
    %157 = arith.andi %156, %19 : vector<1x512xi1>
    %cst_44 = arith.constant 0.000000e+00 : f32
    %158 = vector.shape_cast %157 : vector<1x512xi1> to vector<1x512xi1>
    %159 = vector.broadcast %158 : vector<1x512xi1> to vector<4x512xi1>
    %160 = vector.broadcast %cst_44 : f32 to vector<4x512xf32>
    %161 = arith.select %159, %155, %160 : vector<4x512xi1>, vector<4x512xf32>
    %c449_i32 = arith.constant 449 : i32
    %162 = tpu.dynamic_rotate %1 by %c449_i32 dim 1 : vector<4x512xf32>, i32 -> vector<4x512xf32>
    %163 = arith.andi %7, %16 : vector<1x512xi1>
    %cst_45 = arith.constant 0.000000e+00 : f32
    %164 = vector.shape_cast %163 : vector<1x512xi1> to vector<1x512xi1>
    %165 = vector.broadcast %164 : vector<1x512xi1> to vector<4x512xi1>
    %166 = vector.broadcast %cst_45 : f32 to vector<4x512xf32>
    %167 = arith.select %165, %162, %166 : vector<4x512xi1>, vector<4x512xf32>
    %168 = tpu.concatenate %161, %167 in 0 : vector<4x512xf32>, vector<4x512xf32> -> vector<8x512xf32>
    %c80 = arith.constant 80 : index
    %c0_46 = arith.constant 0 : index
    %169 = vector.load %arg6[%c80, %c0_46] : memref<108x512xf32, #tpu.memory_space<vmem>>, vector<8x512xf32>
    tpu.vector_store %arg6[%c80, %c0_46], %168 {strides = array<i32>} : memref<108x512xf32, #tpu.memory_space<vmem>>, vector<8x512xf32>,
    %c448_i32 = arith.constant 448 : i32
    %170 = tpu.dynamic_rotate %1 by %c448_i32 dim 1 : vector<4x512xf32>, i32 -> vector<4x512xf32>
    %cst_47 = arith.constant 0.000000e+00 : f32
    %171 = vector.shape_cast %7 : vector<1x512xi1> to vector<1x512xi1>
    %172 = vector.broadcast %171 : vector<1x512xi1> to vector<4x512xi1>
    %173 = vector.broadcast %cst_47 : f32 to vector<4x512xf32>
    %174 = arith.select %172, %170, %173 : vector<4x512xi1>, vector<4x512xf32>
    %c447_i32 = arith.constant 447 : i32
    %175 = tpu.dynamic_rotate %1 by %c447_i32 dim 1 : vector<4x512xf32>, i32 -> vector<4x512xf32>
    %176 = arith.andi %7, %19 : vector<1x512xi1>
    %cst_48 = arith.constant 0.000000e+00 : f32
    %177 = vector.shape_cast %176 : vector<1x512xi1> to vector<1x512xi1>
    %178 = vector.broadcast %177 : vector<1x512xi1> to vector<4x512xi1>
    %179 = vector.broadcast %cst_48 : f32 to vector<4x512xf32>
    %180 = arith.select %178, %175, %179 : vector<4x512xi1>, vector<4x512xf32>
    %181 = tpu.concatenate %174, %180 in 0 : vector<4x512xf32>, vector<4x512xf32> -> vector<8x512xf32>
    %c88 = arith.constant 88 : index
    %c0_49 = arith.constant 0 : index
    %182 = vector.load %arg6[%c88, %c0_49] : memref<108x512xf32, #tpu.memory_space<vmem>>, vector<8x512xf32>
    tpu.vector_store %arg6[%c88, %c0_49], %181 {strides = array<i32>} : memref<108x512xf32, #tpu.memory_space<vmem>>, vector<8x512xf32>,
    %c441_i32 = arith.constant 441 : i32
    %183 = tpu.dynamic_rotate %1 by %c441_i32 dim 1 : vector<4x512xf32>, i32 -> vector<4x512xf32>
    %184 = arith.andi %7, %13 : vector<1x512xi1>
    %185 = arith.andi %184, %16 : vector<1x512xi1>
    %cst_50 = arith.constant 0.000000e+00 : f32
    %186 = vector.shape_cast %185 : vector<1x512xi1> to vector<1x512xi1>
    %187 = vector.broadcast %186 : vector<1x512xi1> to vector<4x512xi1>
    %188 = vector.broadcast %cst_50 : f32 to vector<4x512xf32>
    %189 = arith.select %187, %183, %188 : vector<4x512xi1>, vector<4x512xf32>
    %c440_i32 = arith.constant 440 : i32
    %190 = tpu.dynamic_rotate %1 by %c440_i32 dim 1 : vector<4x512xf32>, i32 -> vector<4x512xf32>
    %191 = arith.andi %7, %13 : vector<1x512xi1>
    %cst_51 = arith.constant 0.000000e+00 : f32
    %192 = vector.shape_cast %191 : vector<1x512xi1> to vector<1x512xi1>
    %193 = vector.broadcast %192 : vector<1x512xi1> to vector<4x512xi1>
    %194 = vector.broadcast %cst_51 : f32 to vector<4x512xf32>
    %195 = arith.select %193, %190, %194 : vector<4x512xi1>, vector<4x512xf32>
    %196 = tpu.concatenate %189, %195 in 0 : vector<4x512xf32>, vector<4x512xf32> -> vector<8x512xf32>
    %c96 = arith.constant 96 : index
    %c0_52 = arith.constant 0 : index
    %197 = vector.load %arg6[%c96, %c0_52] : memref<108x512xf32, #tpu.memory_space<vmem>>, vector<8x512xf32>
    tpu.vector_store %arg6[%c96, %c0_52], %196 {strides = array<i32>} : memref<108x512xf32, #tpu.memory_space<vmem>>, vector<8x512xf32>,
    %c439_i32 = arith.constant 439 : i32
    %198 = tpu.dynamic_rotate %1 by %c439_i32 dim 1 : vector<4x512xf32>, i32 -> vector<4x512xf32>
    %199 = arith.andi %7, %13 : vector<1x512xi1>
    %200 = arith.andi %199, %19 : vector<1x512xi1>
    %cst_53 = arith.constant 0.000000e+00 : f32
    %201 = vector.shape_cast %200 : vector<1x512xi1> to vector<1x512xi1>
    %202 = vector.broadcast %201 : vector<1x512xi1> to vector<4x512xi1>
    %203 = vector.broadcast %cst_53 : f32 to vector<4x512xf32>
    %204 = arith.select %202, %198, %203 : vector<4x512xi1>, vector<4x512xf32>
    %c104 = arith.constant 104 : index
    %c0_54 = arith.constant 0 : index
    %205 = vector.load %arg6[%c104, %c0_54] : memref<108x512xf32, #tpu.memory_space<vmem>>, vector<4x512xf32>
    tpu.vector_store %arg6[%c104, %c0_54], %204 {strides = array<i32>} : memref<108x512xf32, #tpu.memory_space<vmem>>, vector<4x512xf32>,
    %c0_55 = arith.constant 0 : index
    %c0_56 = arith.constant 0 : index
    %206 = vector.load %arg4[%c0_55, %c0_56] : memref<8x108xf32, #tpu.memory_space<vmem>>, vector<8x108xf32>
    %c0_57 = arith.constant 0 : index
    %c0_58 = arith.constant 0 : index
    %207 = vector.load %arg6[%c0_57, %c0_58] : memref<108x512xf32, #tpu.memory_space<vmem>>, vector<108x512xf32>
    %cst_59 = arith.constant dense<0.000000e+00> : vector<8x512xf32>
    %208 = tpu.matmul %206, %207, %cst_59 {dimension_numbers = #tpu.dot_dimension_numbers<[1], [0], [0], [1], [0, 0, 1, 1], [], []>} : vector<8x108xf32>, vector<108x512xf32>, vector<8x512xf32> -> vector<8x512xf32>
    %209 = arith.addf %20, %208 : vector<8x512xf32>
    %cst_60 = arith.constant dense<0.000000e+00> : vector<8xf32>
    %210 = vector.multi_reduction <add>, %209, %cst_60 [1] : vector<8x512xf32> to vector<8xf32>
    %211 = vector.shape_cast %210 : vector<8xf32> to vector<8x1xf32>
    %cst_61 = arith.constant 0.001953125 : f32
    %212 = vector.broadcast %cst_61 : f32 to vector<8x1xf32>
    %213 = arith.mulf %211, %212 : vector<8x1xf32>
    %214 = arith.mulf %209, %209 : vector<8x512xf32>
    %cst_62 = arith.constant dense<0.000000e+00> : vector<8xf32>
    %215 = vector.multi_reduction <add>, %214, %cst_62 [1] : vector<8x512xf32> to vector<8xf32>
    %216 = vector.shape_cast %215 : vector<8xf32> to vector<8x1xf32>
    %cst_63 = arith.constant 0.001953125 : f32
    %217 = vector.broadcast %cst_63 : f32 to vector<8x1xf32>
    %218 = arith.mulf %216, %217 : vector<8x1xf32>
    %219 = arith.mulf %213, %213 : vector<8x1xf32>
    %220 = arith.subf %218, %219 : vector<8x1xf32>
    %cst_64 = arith.constant 0.000000e+00 : f32
    %221 = vector.broadcast %cst_64 : f32 to vector<8x1xf32>
    %222 = arith.maximumf %220, %221 : vector<8x1xf32>
    %223 = vector.broadcast %213 : vector<8x1xf32> to vector<8x512xf32>
    %224 = arith.subf %209, %223 : vector<8x512xf32>
    %cst_65 = arith.constant 9.99999974E-6 : f32
    %225 = vector.broadcast %cst_65 : f32 to vector<8x1xf32>
    %226 = arith.addf %222, %225 : vector<8x1xf32>
    %227 = math.rsqrt %226 : vector<8x1xf32>
    %228 = vector.broadcast %227 : vector<8x1xf32> to vector<8x512xf32>
    %229 = arith.mulf %224, %228 : vector<8x512xf32>
    %cst_66 = arith.constant 0.000000e+00 : f32
    %230 = vector.broadcast %cst_66 : f32 to vector<8x512xf32>
    %231 = arith.maximumf %229, %230 : vector<8x512xf32>
    %c0_67 = arith.constant 0 : index
    %c0_68 = arith.constant 0 : index
    %c0_69 = arith.constant 0 : index
    %232 = vector.load %arg5[%c0_67, %c0_68, %c0_69] : memref<1x8x512xf32, #tpu.memory_space<vmem>>, vector<1x8x512xf32>
    %233 = vector.shape_cast %232 : vector<1x8x512xf32> to vector<8x512xf32>
    %234 = vector.shape_cast %231 : vector<8x512xf32> to vector<1x8x512xf32>
    tpu.vector_store %arg5[%c0_67, %c0_68, %c0_69], %234 {strides = array<i32>} : memref<1x8x512xf32, #tpu.memory_space<vmem>>, vector<1x8x512xf32>,
    return
  }
  func.func @transform_0(%arg0: i32, %arg1: i32) -> (i32, i32) {
    %c0_i32 = arith.constant 0 : i32
    %c0_i32_0 = arith.constant 0 : i32
    %c0_i32_1 = arith.constant 0 : i32
    return %c0_i32, %c0_i32_0 : i32, i32
  }
  func.func @transform_1(%arg0: i32, %arg1: i32) -> (i32, i32, i32) {
    %c0_i32 = arith.constant 0 : i32
    %c0_i32_0 = arith.constant 0 : i32
    %c0_i32_1 = arith.constant 0 : i32
    return %arg0, %c0_i32, %c0_i32_0 : i32, i32, i32
  }
  func.func @transform_2(%arg0: i32, %arg1: i32) -> (i32, i32) {
    %c0_i32 = arith.constant 0 : i32
    %c0_i32_0 = arith.constant 0 : i32
    return %arg1, %c0_i32 : i32, i32
  }
  func.func @transform_3(%arg0: i32, %arg1: i32) -> (i32, i32, i32) {
    %c0_i32 = arith.constant 0 : i32
    %c0_i32_0 = arith.constant 0 : i32
    return %arg0, %arg1, %c0_i32 : i32, i32, i32
  }
}

</mosaic_0001>

<llo_original>
// kernel: tpu_custom_call.1
$region0: #{tpu_custom_call.1}
  #allocation0 [shape = 'u32[]', space=smem, size = 0x4, offset = 0x4, fixed_abs, tag = 'smem constant byte address 0x4 - core index']
  #allocation1 [shape = 'u32[144,128]{1,0:T(1,128)}', space=vmem, size = 0x12000, scoped, tag = 'internal scratch']
  #allocation2 [shape = 'f32[108,512]{1,0:T(8,128)}', space=vmem, size = 0x38000, scoped, tag = 'scratch operand']
  %s0 = inlined_call_operand.hbm [shape: s8[6,512], index: 0, kind: input, shape index: {}]
  %s1 = inlined_call_operand.hbm [shape: f32[2,4,512], index: 1, kind: input, shape index: {}]
  %s2 = inlined_call_operand.hbm [shape: f32[8,108], index: 2, kind: input, shape index: {}]
  %s3 = inlined_call_operand.hbm [shape: f32[2,8,512], index: 3, kind: output, shape index: {}]
  %s4 = sld [smem:[#allocation0]]
  $region57: #{tpu_custom_call.1} parent=0
    _
  %s6 = ssub.s32 1, %s4
  %s7 = scalar_select 0, %s6, %s4
  $region1: #{tpu_custom_call.1} parent=0
    #allocation3 [shape = 'u8[4096]{0}', space=vmem, size = 0x1000, scoped, tag = 'input window, operand 0, single buffered']
    #allocation4 [shape = 's32[2]{0}', space=sflag, size = 0x8, scoped, tag = 'scoped memory for tpu_custom_call.1']
    #allocation5 [shape = 's32[2]{0}', space=sflag, size = 0x8, scoped, tag = 'scoped memory for tpu_custom_call.1']
    #allocation6 [shape = 'u8[16384]{0}', space=vmem, size = 0x4000, scoped, tag = 'input window, operand 1']
    #allocation7 [shape = 's32[2]{0}', space=sflag, size = 0x8, scoped, tag = 'scoped memory for tpu_custom_call.1']
    #allocation8 [shape = 'u8[4096]{0}', space=vmem, size = 0x1000, scoped, tag = 'input window, operand 2, single buffered']
    #allocation9 [shape = 'u8[32768]{0}', space=vmem, size = 0x8000, scoped, tag = 'output window, operand 0']
    %8 = vsyncpa [#allocation4], 0
    %9 = vsyncpa [#allocation7], 0
    %s10 = scalar_lea.sflag [#allocation7], 1
    %11 = vsyncpa %s10, 0
    %12 = vsyncpa [#allocation5], 0
    %s13 = scalar_lea.sflag [#allocation5], 1
    %14 = vsyncpa %s13, 0
    loop: start=0, step=1, limit=4
    $region2: #{tpu_custom_call.1} parent=1 // loop_pre_header
      _
    $region3: #{tpu_custom_call.1} parent=1 // loop_header
      %s16 = sphi 0, %s20
      %p17 = scmp.ge.s32.totalorder %s16, 4
      %s23 = sphi 0, %s35
      %s24 = sphi 0, %s31
      %s25 = sphi 0, %s23
      %s26 = sphi 0, %s24
      %s27 = sphi 0, %s25
      %s28 = sphi 0, %s26
      %s36 = sphi 0, %s36
      %s38 = sphi 0, %s36
      %s39 = sphi 0, %s38
      %s53 = sphi 0, %s39
      %s59 = sphi 0, %s61
      %s62 = sphi 0, %s59
      %s63 = sphi 0, %s62
      %s79 = sphi 0, %s63
      %s85 = sphi 0, %s87
      %s88 = sphi 0, %s85
      %s89 = sphi 0, %s88
      %s105 = sphi 0, %s89
      %s113 = sphi 0, %s115
      %s116 = sphi 0, %s113
      %s117 = sphi 0, %s116
      %s133 = sphi 0, %s117
    $region4: #{tpu_custom_call.1} parent=1 // loop_header_branch
      %19 = sbr.rel (%p17) target = $region8
    $region5: #{tpu_custom_call.1} parent=1 // loop_body
      %s21 = ssub.s32 %s16, 1
      %s22 = ssub.s32 %s16, 2
      %s29 = sadd.s32 1, %s24
      %p30 = scmp.ge.s32.totalorder %s29, 1
      %s31 = scalar_select %p30, 0, %s29
      %s32 = sadd.s32 1, %s23
      %s33 = scalar_select %p30, %s32, %s23
      %p34 = scmp.ge.s32.totalorder %s33, 2
      %s35 = scalar_select %p34, 0, %s33
      %s37 = sadd.s32 %s36, 1
      %p40 = scmp.eq.s32.totalorder %s16, 1
      %p41 = scmp.ne.s32.totalorder %s36, %s38
      %p42 = scmp.eq.s32.totalorder %s16, 0
      %p43 = por %p41, %p42
      %p44 = scmp.ne.s32.totalorder %s36, %s38
      %p45 = scmp.eq.s32.totalorder %s21, 1
      %p46 = por %p44, %p45
      %p47 = scmp.ne.s32.totalorder %s38, %s39
      %p48 = scmp.eq.s32.totalorder %s21, 0
      %p49 = por %p47, %p48
      %p50 = scmp.ne.s32.totalorder %s38, %s39
      %p51 = scmp.eq.s32.totalorder %s22, 1
      %p52 = por %p50, %p51
      %p54 = scmp.ne.s32.totalorder %s39, %s53
      %p55 = scmp.eq.s32.totalorder %s22, 0
      %p56 = por %p54, %p55
      %s57 = ssub.s32 %s23, %s35
      %p58 = scmp.eq.s32.totalorder %s57, 0
      %s60 = sadd.s32 %s59, 1
      %s61 = scalar_select %p58, %s59, %s60
      %p64 = pneg %p58
      %p65 = scmp.eq.s32.totalorder %s16, 1
      %p66 = por %p64, %p65
      %p67 = scmp.ne.s32.totalorder %s59, %s62
      %p68 = scmp.eq.s32.totalorder %s16, 0
      %p69 = por %p67, %p68
      %p70 = scmp.ne.s32.totalorder %s59, %s62
      %p71 = scmp.eq.s32.totalorder %s21, 1
      %p72 = por %p70, %p71
      %p73 = scmp.ne.s32.totalorder %s62, %s63
      %p74 = scmp.eq.s32.totalorder %s21, 0
      %p75 = por %p73, %p74
      %p76 = scmp.ne.s32.totalorder %s62, %s63
      %p77 = scmp.eq.s32.totalorder %s22, 1
      %p78 = por %p76, %p77
      %p80 = scmp.ne.s32.totalorder %s63, %s79
      %p81 = scmp.eq.s32.totalorder %s22, 0
      %p82 = por %p80, %p81
      %s83 = ssub.s32 %s24, %s31
      %p84 = scmp.eq.s32.totalorder %s83, 0
      %s86 = sadd.s32 %s85, 1
      %s87 = scalar_select %p84, %s85, %s86
      %p90 = pneg %p84
      %p91 = scmp.eq.s32.totalorder %s16, 1
      %p92 = por %p90, %p91
      %p93 = scmp.ne.s32.totalorder %s85, %s88
      %p94 = scmp.eq.s32.totalorder %s16, 0
      %p95 = por %p93, %p94
      %p96 = scmp.ne.s32.totalorder %s85, %s88
      %p97 = scmp.eq.s32.totalorder %s21, 1
      %p98 = por %p96, %p97
      %p99 = scmp.ne.s32.totalorder %s88, %s89
      %p100 = scmp.eq.s32.totalorder %s21, 0
      %p101 = por %p99, %p100
      %p102 = scmp.ne.s32.totalorder %s88, %s89
      %p103 = scmp.eq.s32.totalorder %s22, 1
      %p104 = por %p102, %p103
      %p106 = scmp.ne.s32.totalorder %s89, %s105
      %p107 = scmp.eq.s32.totalorder %s22, 0
      %p108 = por %p106, %p107
      %s109 = ssub.s32 %s23, %s35
      %s110 = ssub.s32 %s24, %s31
      %s111 = sor.u32 %s109, %s110
      %p112 = scmp.eq.s32.totalorder %s111, 0
      %s114 = sadd.s32 %s113, 1
      %s115 = scalar_select %p112, %s113, %s114
      %p118 = pneg %p112
      %p119 = scmp.eq.s32.totalorder %s16, 1
      %p120 = por %p118, %p119
      %p121 = scmp.ne.s32.totalorder %s113, %s116
      %p122 = scmp.eq.s32.totalorder %s16, 0
      %p123 = por %p121, %p122
      %p124 = scmp.ne.s32.totalorder %s113, %s116
      %p125 = scmp.eq.s32.totalorder %s21, 1
      %p126 = por %p124, %p125
      %p127 = scmp.ne.s32.totalorder %s116, %s117
      %p128 = scmp.eq.s32.totalorder %s21, 0
      %p129 = por %p127, %p128
      %p130 = scmp.ne.s32.totalorder %s116, %s117
      %p131 = scmp.eq.s32.totalorder %s22, 1
      %p132 = por %p130, %p131
      %p134 = scmp.ne.s32.totalorder %s117, %s133
      %p135 = scmp.eq.s32.totalorder %s22, 0
      %p136 = por %p134, %p135
      %p137 = scmp.le.s32.totalorder 1, %s16
      %p138 = scmp.lt.s32.totalorder %s16, 3
      %p139 = pnand %p137, %p138
      %p140 = pneg %p139
      // Predicated region
      $region9: #{tpu_custom_call.1} parent=5 // pred_check
        _
      $region10: #{tpu_custom_call.1} parent=5 // pred_check_branch
        %142 = sbr.rel (%p139) target = $region12
      $region11: #{tpu_custom_call.1} parent=5 // pred_region
        %s143 = ssub.s32 %s16, 1
        // Predicated region
        $region13: #{tpu_custom_call.1} parent=11 // pred_check
          %p144 = pneg %p49
        $region14: #{tpu_custom_call.1} parent=11 // pred_check_branch
          %146 = sbr.rel (%p144) target = $region16
        $region15: #{tpu_custom_call.1} parent=11 // pred_region
          %s148 = ssub.s32 128, 128
          %149 = vsyncadd [#allocation4], %s148
          %s151 = sshll.u32 [#allocation3], 4
          %s152 = int_to_ptr.vmem [resolvable:$true] %s151
          %154 = dma.hbm_to_vmem [thread:$0]  %s0, 128, %s152, [#allocation4]
        $region16: #{tpu_custom_call.1} parent=11 // pred_fallthru
          _
        // Predicated region
        $region17: #{tpu_custom_call.1} parent=11 // pred_check
          %p155 = pneg %p101
        $region18: #{tpu_custom_call.1} parent=11 // pred_check_branch
          %157 = sbr.rel (%p155) target = $region20
        $region19: #{tpu_custom_call.1} parent=11 // pred_region
          %s159 = ssub.s32 128, 128
          %160 = vsyncadd [#allocation7], %s159
          %s161 = smul.addr %s26, 128
          %s162 = scalar_lea.hbm %s2, %s161
          %s164 = sshll.u32 [#allocation8], 4
          %s165 = int_to_ptr.vmem [resolvable:$true] %s164
          %167 = dma.hbm_to_vmem [thread:$0]  %s162, 128, %s165, [#allocation7]
        $region20: #{tpu_custom_call.1} parent=11 // pred_fallthru
          _
      $region12: #{tpu_custom_call.1} parent=5 // pred_fallthru
        _
      %p168 = scmp.lt.s32.totalorder %s16, 2
      // Predicated region
      $region21: #{tpu_custom_call.1} parent=5 // pred_check
        %p169 = pneg %p168
      $region22: #{tpu_custom_call.1} parent=5 // pred_check_branch
        %171 = sbr.rel (%p169) target = $region24
      $region23: #{tpu_custom_call.1} parent=5 // pred_region
        // Predicated region
        $region25: #{tpu_custom_call.1} parent=23 // pred_check
          %p172 = pneg %p69
        $region26: #{tpu_custom_call.1} parent=23 // pred_check_branch
          %174 = sbr.rel (%p172) target = $region28
        $region27: #{tpu_custom_call.1} parent=23 // pred_region
          %s175 = sand.u32 %s16, 1
          %s176 = scalar_lea.sflag [#allocation7], %s175
          %s177 = sand.u32 %s59, 1
          %s178 = smul.addr %s177, 16
          %s179 = scalar_lea.vmem [#allocation6], %s178
          %s181 = ssub.s32 256, 256
          %182 = vsyncadd %s176, %s181
          %s183 = smul.addr %s23, 4
          %s184 = smul.addr %s183, 64
          %s185 = scalar_lea.hbm %s1, %s184
          %s187 = sshll.u32 %s179, 4
          %s188 = int_to_ptr.vmem [resolvable:$true] %s187
          %190 = dma.hbm_to_vmem [thread:$0]  %s185, 256, %s188, %s176
        $region28: #{tpu_custom_call.1} parent=23 // pred_fallthru
          _
      $region24: #{tpu_custom_call.1} parent=5 // pred_fallthru
        _
      %p191 = scmp.le.s32.totalorder 1, %s16
      %p192 = scmp.lt.s32.totalorder %s16, 3
      %p193 = pnand %p191, %p192
      %p194 = pneg %p193
      // Predicated region
      $region29: #{tpu_custom_call.1} parent=5 // pred_check
        _
      $region30: #{tpu_custom_call.1} parent=5 // pred_check_branch
        %196 = sbr.rel (%p193) target = $region32
      $region31: #{tpu_custom_call.1} parent=5 // pred_region
        %s197 = ssub.s32 %s16, 1
        // Predicated region
        $region33: #{tpu_custom_call.1} parent=31 // pred_check
          %p198 = pneg %p49
        $region34: #{tpu_custom_call.1} parent=31 // pred_check_branch
          %200 = sbr.rel (%p198) target = $region36
        $region35: #{tpu_custom_call.1} parent=31 // pred_region
          %201 = dma.done [#allocation4], 128
        $region36: #{tpu_custom_call.1} parent=31 // pred_fallthru
          _
        %s202 = sand.u32 %s21, 1
        %s203 = scalar_lea.sflag [#allocation7], %s202
        %s204 = sand.u32 %s62, 1
        %s205 = smul.addr %s204, 16
        %s206 = scalar_lea.vmem [#allocation6], %s205
        // Predicated region
        $region37: #{tpu_custom_call.1} parent=31 // pred_check
          %p207 = pneg %p75
        $region38: #{tpu_custom_call.1} parent=31 // pred_check_branch
          %209 = sbr.rel (%p207) target = $region40
        $region39: #{tpu_custom_call.1} parent=31 // pred_region
          %210 = dma.done %s203, 256
        $region40: #{tpu_custom_call.1} parent=31 // pred_fallthru
          _
        // Predicated region
        $region41: #{tpu_custom_call.1} parent=31 // pred_check
          %p211 = pneg %p101
        $region42: #{tpu_custom_call.1} parent=31 // pred_check_branch
          %213 = sbr.rel (%p211) target = $region44
        $region43: #{tpu_custom_call.1} parent=31 // pred_region
          %214 = dma.done [#allocation7], 128
        $region44: #{tpu_custom_call.1} parent=31 // pred_fallthru
          _
        %p215 = pneg %p49
        %p216 = pneg %p46
        %s217 = sand.u32 %s21, 1
        %s218 = scalar_lea.sflag [#allocation7], %s217
        %s219 = sand.u32 %s62, 1
        %s220 = smul.addr %s219, 16
        %s221 = scalar_lea.vmem [#allocation6], %s220
        %p222 = pneg %p75
        %p223 = pneg %p72
        %p224 = pneg %p101
        %p225 = pneg %p98
        %p226 = pneg %p129
        %p227 = pneg %p126
        %s228 = sand.u32 %s116, 1
        %s229 = scalar_lea.sflag [#allocation5], %s228
        %s230 = sand.u32 %s116, 1
        %s231 = smul.addr %s230, 32
        %s232 = scalar_lea.vmem [#allocation9], %s231
        %v235 = vld [vmem:[%s206] sm:$0xff]
        %v236 = vld [vmem:[%s206 + $0x8] sm:$0xff]
        %v237 = vld [vmem:[#allocation3] sm:$0x55]
        %vm238 = vnez %v237
        %v239 = vld [vmem:[#allocation3] sm:$0xaa]
        %vm240 = vnez %v239
        %v243 = vcombine.high %v235, %v235
        %v244 = vcombine.high %v236, %v236
        %247 = vrot.lane.b32.xlu0 %v235, 73
        %v248 = vpop.permute.xlu0 %247
        %249 = vrot.lane.b32.xlu0 %v243, 73
        %v250 = vpop.permute.xlu0 %249
        %251 = vrot.lane.b32.xlu0 %v236, 73
        %v252 = vpop.permute.xlu0 %251
        %253 = vrot.lane.b32.xlu0 %v244, 73
        %v254 = vpop.permute.xlu0 %253
        %v255 = vlaneseq
        %v256 = vand.u32 %v255, 127
        %vm257 = vcmp.lt.s32.totalorder %v256, 73
        %v258 = vsel %vm257, %v252, %v254
        %v259 = vsel %vm257, %v250, %v252
        %v260 = vsel %vm257, %v248, %v250
        %v261 = vsel %vm257, %v254, %v248
        %v262 = vsel %vm238, 16843009, 0
        %v264 = vshrl.u32 %v262, 16
        %v266 = vrot.slane %v264, 6
        %v267 = vrot.slane %v266, 2
        %vm268 = vnez %v267
        %vm269 = vmand %vm238, %vm268
        %v270 = vsel %vm240, 16843009, 0
        %v271 = vrot.slane %v270, 7
        %v272 = vrot.slane %v271, 2
        %vm273 = vnez %v272
        %vm274 = vmand %vm269, %vm273
        %v275 = vsel %vm274, 16843009, 0
        %v276 = vunpack.c.0.s8 %v275
        %v277 = vunpack.c.1.s8 %v275
        %v278 = vunpack.c.2.s8 %v275
        %v279 = vunpack.c.3.s8 %v275
        %vm280 = vcmp.ne.s32.totalorder %v276, 0
        %vm281 = vcmp.ne.s32.totalorder %v277, 0
        %vm282 = vcmp.ne.s32.totalorder %v278, 0
        %vm283 = vcmp.ne.s32.totalorder %v279, 0
        %v284 = vsel %vm280, 1, 0
        %v285 = vsel %vm281, 1, 0
        %v286 = vsel %vm282, 1, 0
        %v287 = vsel %vm283, 1, 0
        %v288 = vlaneseq
        %v289 = vshrl.u32 %v288, 7
        %v290 = vsub.s32 0, %v289
        %v291 = vrot.slane %v284, %v290
        %v292 = vlaneseq
        %v293 = vshrl.u32 %v292, 7
        %v294 = vsub.s32 0, %v293
        %v295 = vrot.slane %v285, %v294
        %v296 = vlaneseq
        %v297 = vshrl.u32 %v296, 7
        %v298 = vsub.s32 0, %v297
        %v299 = vrot.slane %v286, %v298
        %v300 = vlaneseq
        %v301 = vshrl.u32 %v300, 7
        %v302 = vsub.s32 0, %v301
        %v303 = vrot.slane %v287, %v302
        %vm304 = vcmp.eq.s32.totalorder %v291, 1
        %vm305 = vcmp.eq.s32.totalorder %v295, 1
        %vm306 = vcmp.eq.s32.totalorder %v299, 1
        %vm307 = vcmp.eq.s32.totalorder %v303, 1
        %v308 = vsel %vm304, %v261, 0.0
        %v309 = vsel %vm305, %v260, 0.0
        %v310 = vsel %vm306, %v259, 0.0
        %v311 = vsel %vm307, %v258, 0.0
        %312 = vrot.lane.b32.xlu0 %v235, 72
        %v313 = vpop.permute.xlu0 %312
        %314 = vrot.lane.b32.xlu0 %v243, 72
        %v315 = vpop.permute.xlu0 %314
        %316 = vrot.lane.b32.xlu0 %v236, 72
        %v317 = vpop.permute.xlu0 %316
        %318 = vrot.lane.b32.xlu0 %v244, 72
        %v319 = vpop.permute.xlu0 %318
        %vm320 = vcmp.lt.s32.totalorder %v256, 72
        %v321 = vsel %vm320, %v317, %v319
        %v322 = vsel %vm320, %v315, %v317
        %v323 = vsel %vm320, %v313, %v315
        %v324 = vsel %vm320, %v319, %v313
        %v325 = vsel %vm269, 16843009, 0
        %v326 = vunpack.c.0.s8 %v325
        %v327 = vunpack.c.1.s8 %v325
        %v328 = vunpack.c.2.s8 %v325
        %v329 = vunpack.c.3.s8 %v325
        %vm330 = vcmp.ne.s32.totalorder %v326, 0
        %vm331 = vcmp.ne.s32.totalorder %v327, 0
        %vm332 = vcmp.ne.s32.totalorder %v328, 0
        %vm333 = vcmp.ne.s32.totalorder %v329, 0
        %v334 = vsel %vm330, 1, 0
        %v335 = vsel %vm331, 1, 0
        %v336 = vsel %vm332, 1, 0
        %v337 = vsel %vm333, 1, 0
        %v338 = vlaneseq
        %v339 = vshrl.u32 %v338, 7
        %v340 = vsub.s32 0, %v339
        %v341 = vrot.slane %v334, %v340
        %v342 = vlaneseq
        %v343 = vshrl.u32 %v342, 7
        %v344 = vsub.s32 0, %v343
        %v345 = vrot.slane %v335, %v344
        %v346 = vlaneseq
        %v347 = vshrl.u32 %v346, 7
        %v348 = vsub.s32 0, %v347
        %v349 = vrot.slane %v336, %v348
        %v350 = vlaneseq
        %v351 = vshrl.u32 %v350, 7
        %v352 = vsub.s32 0, %v351
        %v353 = vrot.slane %v337, %v352
        %vm354 = vcmp.eq.s32.totalorder %v341, 1
        %vm355 = vcmp.eq.s32.totalorder %v345, 1
        %vm356 = vcmp.eq.s32.totalorder %v349, 1
        %vm357 = vcmp.eq.s32.totalorder %v353, 1
        %v358 = vsel %vm354, %v324, 0.0
        %v359 = vsel %vm355, %v323, 0.0
        %v360 = vsel %vm356, %v322, 0.0
        %v361 = vsel %vm357, %v321, 0.0
        %v366 = vrot.slane %v358, 4
        %v367 = vrot.slane %v359, 4
        %v368 = vrot.slane %v360, 4
        %v369 = vrot.slane %v361, 4
        %vm374 = vcmask 1043456
        %v375 = vsel %vm374, %v308, %v366
        %v376 = vsel %vm374, %v309, %v367
        %v377 = vsel %vm374, %v310, %v368
        %v378 = vsel %vm374, %v311, %v369
        %379 = vst [vmem:[#allocation2] sm:$0xff] %v375
        %380 = vst [vmem:[#allocation2 + $0x8] sm:$0xff] %v376
        %381 = vst [vmem:[#allocation2 + $0x10] sm:$0xff] %v377
        %382 = vst [vmem:[#allocation2 + $0x18] sm:$0xff] %v378
        %383 = vrot.lane.b32.xlu0 %v235, 71
        %v384 = vpop.permute.xlu0 %383
        %385 = vrot.lane.b32.xlu0 %v243, 71
        %v386 = vpop.permute.xlu0 %385
        %387 = vrot.lane.b32.xlu0 %v236, 71
        %v388 = vpop.permute.xlu0 %387
        %389 = vrot.lane.b32.xlu0 %v244, 71
        %v390 = vpop.permute.xlu0 %389
        %vm391 = vcmp.lt.s32.totalorder %v256, 71
        %v392 = vsel %vm391, %v388, %v390
        %v393 = vsel %vm391, %v386, %v388
        %v394 = vsel %vm391, %v384, %v386
        %v395 = vsel %vm391, %v390, %v384
        %v397 = vshrl.u32 %v270, 8
        %v399 = vrot.slane %v397, 7
        %v400 = vrot.slane %v399, 2
        %vm401 = vnez %v400
        %vm402 = vmand %vm269, %vm401
        %v403 = vsel %vm402, 16843009, 0
        %v404 = vunpack.c.0.s8 %v403
        %v405 = vunpack.c.1.s8 %v403
        %v406 = vunpack.c.2.s8 %v403
        %v407 = vunpack.c.3.s8 %v403
        %vm408 = vcmp.ne.s32.totalorder %v404, 0
        %vm409 = vcmp.ne.s32.totalorder %v405, 0
        %vm410 = vcmp.ne.s32.totalorder %v406, 0
        %vm411 = vcmp.ne.s32.totalorder %v407, 0
        %v412 = vsel %vm408, 1, 0
        %v413 = vsel %vm409, 1, 0
        %v414 = vsel %vm410, 1, 0
        %v415 = vsel %vm411, 1, 0
        %v416 = vlaneseq
        %v417 = vshrl.u32 %v416, 7
        %v418 = vsub.s32 0, %v417
        %v419 = vrot.slane %v412, %v418
        %v420 = vlaneseq
        %v421 = vshrl.u32 %v420, 7
        %v422 = vsub.s32 0, %v421
        %v423 = vrot.slane %v413, %v422
        %v424 = vlaneseq
        %v425 = vshrl.u32 %v424, 7
        %v426 = vsub.s32 0, %v425
        %v427 = vrot.slane %v414, %v426
        %v428 = vlaneseq
        %v429 = vshrl.u32 %v428, 7
        %v430 = vsub.s32 0, %v429
        %v431 = vrot.slane %v415, %v430
        %vm432 = vcmp.eq.s32.totalorder %v419, 1
        %vm433 = vcmp.eq.s32.totalorder %v423, 1
        %vm434 = vcmp.eq.s32.totalorder %v427, 1
        %vm435 = vcmp.eq.s32.totalorder %v431, 1
        %v436 = vsel %vm432, %v395, 0.0
        %v437 = vsel %vm433, %v394, 0.0
        %v438 = vsel %vm434, %v393, 0.0
        %v439 = vsel %vm435, %v392, 0.0
        %440 = vrot.lane.b32.xlu0 %v235, 65
        %v441 = vpop.permute.xlu0 %440
        %442 = vrot.lane.b32.xlu0 %v243, 65
        %v443 = vpop.permute.xlu0 %442
        %444 = vrot.lane.b32.xlu0 %v236, 65
        %v445 = vpop.permute.xlu0 %444
        %446 = vrot.lane.b32.xlu0 %v244, 65
        %v447 = vpop.permute.xlu0 %446
        %vm448 = vcmp.lt.s32.totalorder %v256, 65
        %v449 = vsel %vm448, %v445, %v447
        %v450 = vsel %vm448, %v443, %v445
        %v451 = vsel %vm448, %v441, %v443
        %v452 = vsel %vm448, %v447, %v441
        %vm453 = vmand %vm238, %vm273
        %v454 = vsel %vm453, 16843009, 0
        %v455 = vunpack.c.0.s8 %v454
        %v456 = vunpack.c.1.s8 %v454
        %v457 = vunpack.c.2.s8 %v454
        %v458 = vunpack.c.3.s8 %v454
        %vm459 = vcmp.ne.s32.totalorder %v455, 0
        %vm460 = vcmp.ne.s32.totalorder %v456, 0
        %vm461 = vcmp.ne.s32.totalorder %v457, 0
        %vm462 = vcmp.ne.s32.totalorder %v458, 0
        %v463 = vsel %vm459, 1, 0
        %v464 = vsel %vm460, 1, 0
        %v465 = vsel %vm461, 1, 0
        %v466 = vsel %vm462, 1, 0
        %v467 = vlaneseq
        %v468 = vshrl.u32 %v467, 7
        %v469 = vsub.s32 0, %v468
        %v470 = vrot.slane %v463, %v469
        %v471 = vlaneseq
        %v472 = vshrl.u32 %v471, 7
        %v473 = vsub.s32 0, %v472
        %v474 = vrot.slane %v464, %v473
        %v475 = vlaneseq
        %v476 = vshrl.u32 %v475, 7
        %v477 = vsub.s32 0, %v476
        %v478 = vrot.slane %v465, %v477
        %v479 = vlaneseq
        %v480 = vshrl.u32 %v479, 7
        %v481 = vsub.s32 0, %v480
        %v482 = vrot.slane %v466, %v481
        %vm483 = vcmp.eq.s32.totalorder %v470, 1
        %vm484 = vcmp.eq.s32.totalorder %v474, 1
        %vm485 = vcmp.eq.s32.totalorder %v478, 1
        %vm486 = vcmp.eq.s32.totalorder %v482, 1
        %v487 = vsel %vm483, %v452, 0.0
        %v488 = vsel %vm484, %v451, 0.0
        %v489 = vsel %vm485, %v450, 0.0
        %v490 = vsel %vm486, %v449, 0.0
        %v495 = vrot.slane %v487, 4
        %v496 = vrot.slane %v488, 4
        %v497 = vrot.slane %v489, 4
        %v498 = vrot.slane %v490, 4
        %v503 = vsel %vm374, %v436, %v495
        %v504 = vsel %vm374, %v437, %v496
        %v505 = vsel %vm374, %v438, %v497
        %v506 = vsel %vm374, %v439, %v498
        %507 = vst [vmem:[#allocation2 + $0x20] sm:$0xff] %v503
        %508 = vst [vmem:[#allocation2 + $0x28] sm:$0xff] %v504
        %509 = vst [vmem:[#allocation2 + $0x30] sm:$0xff] %v505
        %510 = vst [vmem:[#allocation2 + $0x38] sm:$0xff] %v506
        %511 = vrot.lane.b32.xlu0 %v235, 64
        %v512 = vpop.permute.xlu0 %511
        %513 = vrot.lane.b32.xlu0 %v243, 64
        %v514 = vpop.permute.xlu0 %513
        %515 = vrot.lane.b32.xlu0 %v236, 64
        %v516 = vpop.permute.xlu0 %515
        %517 = vrot.lane.b32.xlu0 %v244, 64
        %v518 = vpop.permute.xlu0 %517
        %vm519 = vcmp.lt.s32.totalorder %v256, 64
        %v520 = vsel %vm519, %v516, %v518
        %v521 = vsel %vm519, %v514, %v516
        %v522 = vsel %vm519, %v512, %v514
        %v523 = vsel %vm519, %v518, %v512
        %v524 = vunpack.c.0.s8 %v262
        %v525 = vunpack.c.1.s8 %v262
        %v526 = vunpack.c.2.s8 %v262
        %v527 = vunpack.c.3.s8 %v262
        %vm528 = vcmp.ne.s32.totalorder %v524, 0
        %vm529 = vcmp.ne.s32.totalorder %v525, 0
        %vm530 = vcmp.ne.s32.totalorder %v526, 0
        %vm531 = vcmp.ne.s32.totalorder %v527, 0
        %v532 = vsel %vm528, 1, 0
        %v533 = vsel %vm529, 1, 0
        %v534 = vsel %vm530, 1, 0
        %v535 = vsel %vm531, 1, 0
        %v536 = vlaneseq
        %v537 = vshrl.u32 %v536, 7
        %v538 = vsub.s32 0, %v537
        %v539 = vrot.slane %v532, %v538
        %v540 = vlaneseq
        %v541 = vshrl.u32 %v540, 7
        %v542 = vsub.s32 0, %v541
        %v543 = vrot.slane %v533, %v542
        %v544 = vlaneseq
        %v545 = vshrl.u32 %v544, 7
        %v546 = vsub.s32 0, %v545
        %v547 = vrot.slane %v534, %v546
        %v548 = vlaneseq
        %v549 = vshrl.u32 %v548, 7
        %v550 = vsub.s32 0, %v549
        %v551 = vrot.slane %v535, %v550
        %vm552 = vcmp.eq.s32.totalorder %v539, 1
        %vm553 = vcmp.eq.s32.totalorder %v543, 1
        %vm554 = vcmp.eq.s32.totalorder %v547, 1
        %vm555 = vcmp.eq.s32.totalorder %v551, 1
        %v556 = vsel %vm552, %v523, 0.0
        %v557 = vsel %vm553, %v522, 0.0
        %v558 = vsel %vm554, %v521, 0.0
        %v559 = vsel %vm555, %v520, 0.0
        %560 = vrot.lane.b32.xlu0 %v235, 63
        %v561 = vpop.permute.xlu0 %560
        %562 = vrot.lane.b32.xlu0 %v243, 63
        %v563 = vpop.permute.xlu0 %562
        %564 = vrot.lane.b32.xlu0 %v236, 63
        %v565 = vpop.permute.xlu0 %564
        %566 = vrot.lane.b32.xlu0 %v244, 63
        %v567 = vpop.permute.xlu0 %566
        %vm568 = vcmp.lt.s32.totalorder %v256, 63
        %v569 = vsel %vm568, %v565, %v567
        %v570 = vsel %vm568, %v563, %v565
        %v571 = vsel %vm568, %v561, %v563
        %v572 = vsel %vm568, %v567, %v561
        %vm573 = vmand %vm238, %vm401
        %v574 = vsel %vm573, 16843009, 0
        %v575 = vunpack.c.0.s8 %v574
        %v576 = vunpack.c.1.s8 %v574
        %v577 = vunpack.c.2.s8 %v574
        %v578 = vunpack.c.3.s8 %v574
        %vm579 = vcmp.ne.s32.totalorder %v575, 0
        %vm580 = vcmp.ne.s32.totalorder %v576, 0
        %vm581 = vcmp.ne.s32.totalorder %v577, 0
        %vm582 = vcmp.ne.s32.totalorder %v578, 0
        %v583 = vsel %vm579, 1, 0
        %v584 = vsel %vm580, 1, 0
        %v585 = vsel %vm581, 1, 0
        %v586 = vsel %vm582, 1, 0
        %v587 = vlaneseq
        %v588 = vshrl.u32 %v587, 7
        %v589 = vsub.s32 0, %v588
        %v590 = vrot.slane %v583, %v589
        %v591 = vlaneseq
        %v592 = vshrl.u32 %v591, 7
        %v593 = vsub.s32 0, %v592
        %v594 = vrot.slane %v584, %v593
        %v595 = vlaneseq
        %v596 = vshrl.u32 %v595, 7
        %v597 = vsub.s32 0, %v596
        %v598 = vrot.slane %v585, %v597
        %v599 = vlaneseq
        %v600 = vshrl.u32 %v599, 7
        %v601 = vsub.s32 0, %v600
        %v602 = vrot.slane %v586, %v601
        %vm603 = vcmp.eq.s32.totalorder %v590, 1
        %vm604 = vcmp.eq.s32.totalorder %v594, 1
        %vm605 = vcmp.eq.s32.totalorder %v598, 1
        %vm606 = vcmp.eq.s32.totalorder %v602, 1
        %v607 = vsel %vm603, %v572, 0.0
        %v608 = vsel %vm604, %v571, 0.0
        %v609 = vsel %vm605, %v570, 0.0
        %v610 = vsel %vm606, %v569, 0.0
        %v615 = vrot.slane %v607, 4
        %v616 = vrot.slane %v608, 4
        %v617 = vrot.slane %v609, 4
        %v618 = vrot.slane %v610, 4
        %v623 = vsel %vm374, %v556, %v615
        %v624 = vsel %vm374, %v557, %v616
        %v625 = vsel %vm374, %v558, %v617
        %v626 = vsel %vm374, %v559, %v618
        %627 = vst [vmem:[#allocation2 + $0x40] sm:$0xff] %v623
        %628 = vst [vmem:[#allocation2 + $0x48] sm:$0xff] %v624
        %629 = vst [vmem:[#allocation2 + $0x50] sm:$0xff] %v625
        %630 = vst [vmem:[#allocation2 + $0x58] sm:$0xff] %v626
        %631 = vrot.lane.b32.xlu0 %v235, 57
        %v632 = vpop.permute.xlu0 %631
        %633 = vrot.lane.b32.xlu0 %v243, 57
        %v634 = vpop.permute.xlu0 %633
        %635 = vrot.lane.b32.xlu0 %v236, 57
        %v636 = vpop.permute.xlu0 %635
        %637 = vrot.lane.b32.xlu0 %v244, 57
        %v638 = vpop.permute.xlu0 %637
        %vm639 = vcmp.lt.s32.totalorder %v256, 57
        %v640 = vsel %vm639, %v636, %v638
        %v641 = vsel %vm639, %v634, %v636
        %v642 = vsel %vm639, %v632, %v634
        %v643 = vsel %vm639, %v638, %v632
        %v644 = vshrl.u32 %v262, 24
        %v646 = vrot.slane %v644, 6
        %v647 = vrot.slane %v646, 2
        %vm648 = vnez %v647
        %vm649 = vmand %vm238, %vm648
        %vm650 = vmand %vm649, %vm273
        %v651 = vsel %vm650, 16843009, 0
        %v652 = vunpack.c.0.s8 %v651
        %v653 = vunpack.c.1.s8 %v651
        %v654 = vunpack.c.2.s8 %v651
        %v655 = vunpack.c.3.s8 %v651
        %vm656 = vcmp.ne.s32.totalorder %v652, 0
        %vm657 = vcmp.ne.s32.totalorder %v653, 0
        %vm658 = vcmp.ne.s32.totalorder %v654, 0
        %vm659 = vcmp.ne.s32.totalorder %v655, 0
        %v660 = vsel %vm656, 1, 0
        %v661 = vsel %vm657, 1, 0
        %v662 = vsel %vm658, 1, 0
        %v663 = vsel %vm659, 1, 0
        %v664 = vlaneseq
        %v665 = vshrl.u32 %v664, 7
        %v666 = vsub.s32 0, %v665
        %v667 = vrot.slane %v660, %v666
        %v668 = vlaneseq
        %v669 = vshrl.u32 %v668, 7
        %v670 = vsub.s32 0, %v669
        %v671 = vrot.slane %v661, %v670
        %v672 = vlaneseq
        %v673 = vshrl.u32 %v672, 7
        %v674 = vsub.s32 0, %v673
        %v675 = vrot.slane %v662, %v674
        %v676 = vlaneseq
        %v677 = vshrl.u32 %v676, 7
        %v678 = vsub.s32 0, %v677
        %v679 = vrot.slane %v663, %v678
        %vm680 = vcmp.eq.s32.totalorder %v667, 1
        %vm681 = vcmp.eq.s32.totalorder %v671, 1
        %vm682 = vcmp.eq.s32.totalorder %v675, 1
        %vm683 = vcmp.eq.s32.totalorder %v679, 1
        %v684 = vsel %vm680, %v643, 0.0
        %v685 = vsel %vm681, %v642, 0.0
        %v686 = vsel %vm682, %v641, 0.0
        %v687 = vsel %vm683, %v640, 0.0
        %688 = vrot.lane.b32.xlu0 %v235, 56
        %v689 = vpop.permute.xlu0 %688
        %690 = vrot.lane.b32.xlu0 %v243, 56
        %v691 = vpop.permute.xlu0 %690
        %692 = vrot.lane.b32.xlu0 %v236, 56
        %v693 = vpop.permute.xlu0 %692
        %694 = vrot.lane.b32.xlu0 %v244, 56
        %v695 = vpop.permute.xlu0 %694
        %vm696 = vcmp.lt.s32.totalorder %v256, 56
        %v697 = vsel %vm696, %v693, %v695
        %v698 = vsel %vm696, %v691, %v693
        %v699 = vsel %vm696, %v689, %v691
        %v700 = vsel %vm696, %v695, %v689
        %v701 = vsel %vm649, 16843009, 0
        %v702 = vunpack.c.0.s8 %v701
        %v703 = vunpack.c.1.s8 %v701
        %v704 = vunpack.c.2.s8 %v701
        %v705 = vunpack.c.3.s8 %v701
        %vm706 = vcmp.ne.s32.totalorder %v702, 0
        %vm707 = vcmp.ne.s32.totalorder %v703, 0
        %vm708 = vcmp.ne.s32.totalorder %v704, 0
        %vm709 = vcmp.ne.s32.totalorder %v705, 0
        %v710 = vsel %vm706, 1, 0
        %v711 = vsel %vm707, 1, 0
        %v712 = vsel %vm708, 1, 0
        %v713 = vsel %vm709, 1, 0
        %v714 = vlaneseq
        %v715 = vshrl.u32 %v714, 7
        %v716 = vsub.s32 0, %v715
        %v717 = vrot.slane %v710, %v716
        %v718 = vlaneseq
        %v719 = vshrl.u32 %v718, 7
        %v720 = vsub.s32 0, %v719
        %v721 = vrot.slane %v711, %v720
        %v722 = vlaneseq
        %v723 = vshrl.u32 %v722, 7
        %v724 = vsub.s32 0, %v723
        %v725 = vrot.slane %v712, %v724
        %v726 = vlaneseq
        %v727 = vshrl.u32 %v726, 7
        %v728 = vsub.s32 0, %v727
        %v729 = vrot.slane %v713, %v728
        %vm730 = vcmp.eq.s32.totalorder %v717, 1
        %vm731 = vcmp.eq.s32.totalorder %v721, 1
        %vm732 = vcmp.eq.s32.totalorder %v725, 1
        %vm733 = vcmp.eq.s32.totalorder %v729, 1
        %v734 = vsel %vm730, %v700, 0.0
        %v735 = vsel %vm731, %v699, 0.0
        %v736 = vsel %vm732, %v698, 0.0
        %v737 = vsel %vm733, %v697, 0.0
        %v742 = vrot.slane %v734, 4
        %v743 = vrot.slane %v735, 4
        %v744 = vrot.slane %v736, 4
        %v745 = vrot.slane %v737, 4
        %v750 = vsel %vm374, %v684, %v742
        %v751 = vsel %vm374, %v685, %v743
        %v752 = vsel %vm374, %v686, %v744
        %v753 = vsel %vm374, %v687, %v745
        %754 = vst [vmem:[#allocation2 + $0x60] sm:$0xff] %v750
        %755 = vst [vmem:[#allocation2 + $0x68] sm:$0xff] %v751
        %756 = vst [vmem:[#allocation2 + $0x70] sm:$0xff] %v752
        %757 = vst [vmem:[#allocation2 + $0x78] sm:$0xff] %v753
        %758 = vrot.lane.b32.xlu0 %v235, 55
        %v759 = vpop.permute.xlu0 %758
        %760 = vrot.lane.b32.xlu0 %v243, 55
        %v761 = vpop.permute.xlu0 %760
        %762 = vrot.lane.b32.xlu0 %v236, 55
        %v763 = vpop.permute.xlu0 %762
        %764 = vrot.lane.b32.xlu0 %v244, 55
        %v765 = vpop.permute.xlu0 %764
        %vm766 = vcmp.lt.s32.totalorder %v256, 55
        %v767 = vsel %vm766, %v763, %v765
        %v768 = vsel %vm766, %v761, %v763
        %v769 = vsel %vm766, %v759, %v761
        %v770 = vsel %vm766, %v765, %v759
        %vm771 = vmand %vm649, %vm401
        %v772 = vsel %vm771, 16843009, 0
        %v773 = vunpack.c.0.s8 %v772
        %v774 = vunpack.c.1.s8 %v772
        %v775 = vunpack.c.2.s8 %v772
        %v776 = vunpack.c.3.s8 %v772
        %vm777 = vcmp.ne.s32.totalorder %v773, 0
        %vm778 = vcmp.ne.s32.totalorder %v774, 0
        %vm779 = vcmp.ne.s32.totalorder %v775, 0
        %vm780 = vcmp.ne.s32.totalorder %v776, 0
        %v781 = vsel %vm777, 1, 0
        %v782 = vsel %vm778, 1, 0
        %v783 = vsel %vm779, 1, 0
        %v784 = vsel %vm780, 1, 0
        %v785 = vlaneseq
        %v786 = vshrl.u32 %v785, 7
        %v787 = vsub.s32 0, %v786
        %v788 = vrot.slane %v781, %v787
        %v789 = vlaneseq
        %v790 = vshrl.u32 %v789, 7
        %v791 = vsub.s32 0, %v790
        %v792 = vrot.slane %v782, %v791
        %v793 = vlaneseq
        %v794 = vshrl.u32 %v793, 7
        %v795 = vsub.s32 0, %v794
        %v796 = vrot.slane %v783, %v795
        %v797 = vlaneseq
        %v798 = vshrl.u32 %v797, 7
        %v799 = vsub.s32 0, %v798
        %v800 = vrot.slane %v784, %v799
        %vm801 = vcmp.eq.s32.totalorder %v788, 1
        %vm802 = vcmp.eq.s32.totalorder %v792, 1
        %vm803 = vcmp.eq.s32.totalorder %v796, 1
        %vm804 = vcmp.eq.s32.totalorder %v800, 1
        %v805 = vsel %vm801, %v770, 0.0
        %v806 = vsel %vm802, %v769, 0.0
        %v807 = vsel %vm803, %v768, 0.0
        %v808 = vsel %vm804, %v767, 0.0
        %809 = vrot.lane.b32.xlu0 %v235, 9
        %v810 = vpop.permute.xlu0 %809
        %811 = vrot.lane.b32.xlu0 %v243, 9
        %v812 = vpop.permute.xlu0 %811
        %813 = vrot.lane.b32.xlu0 %v236, 9
        %v814 = vpop.permute.xlu0 %813
        %815 = vrot.lane.b32.xlu0 %v244, 9
        %v816 = vpop.permute.xlu0 %815
        %vm817 = vcmp.lt.s32.totalorder %v256, 9
        %v818 = vsel %vm817, %v814, %v816
        %v819 = vsel %vm817, %v812, %v814
        %v820 = vsel %vm817, %v810, %v812
        %v821 = vsel %vm817, %v816, %v810
        %v822 = vshll.u32 %v270, 16
        %v824 = vrot.slane %v822, 7
        %v825 = vrot.slane %v824, 2
        %vm826 = vnez %v825
        %vm827 = vmand %vm238, %vm826
        %v828 = vsel %vm827, 16843009, 0
        %v829 = vunpack.c.0.s8 %v828
        %v830 = vunpack.c.1.s8 %v828
        %v831 = vunpack.c.2.s8 %v828
        %v832 = vunpack.c.3.s8 %v828
        %vm833 = vcmp.ne.s32.totalorder %v829, 0
        %vm834 = vcmp.ne.s32.totalorder %v830, 0
        %vm835 = vcmp.ne.s32.totalorder %v831, 0
        %vm836 = vcmp.ne.s32.totalorder %v832, 0
        %v837 = vsel %vm833, 1, 0
        %v838 = vsel %vm834, 1, 0
        %v839 = vsel %vm835, 1, 0
        %v840 = vsel %vm836, 1, 0
        %v841 = vrot.slane %v837, 2
        %v842 = vrot.slane %v838, 2
        %v843 = vrot.slane %v839, 2
        %v844 = vrot.slane %v840, 2
        %vm845 = vcmp.ne.s32.totalorder %v841, 0
        %vm846 = vcmp.ne.s32.totalorder %v842, 0
        %vm847 = vcmp.ne.s32.totalorder %v843, 0
        %vm848 = vcmp.ne.s32.totalorder %v844, 0
        %v849 = vsel %vm845, 1, 0
        %v850 = vsel %vm846, 1, 0
        %v851 = vsel %vm847, 1, 0
        %v852 = vsel %vm848, 1, 0
        %v853 = vlaneseq
        %v854 = vshrl.u32 %v853, 7
        %v855 = vsub.s32 0, %v854
        %v856 = vrot.slane %v849, %v855
        %v857 = vlaneseq
        %v858 = vshrl.u32 %v857, 7
        %v859 = vsub.s32 0, %v858
        %v860 = vrot.slane %v850, %v859
        %v861 = vlaneseq
        %v862 = vshrl.u32 %v861, 7
        %v863 = vsub.s32 0, %v862
        %v864 = vrot.slane %v851, %v863
        %v865 = vlaneseq
        %v866 = vshrl.u32 %v865, 7
        %v867 = vsub.s32 0, %v866
        %v868 = vrot.slane %v852, %v867
        %vm869 = vcmp.eq.s32.totalorder %v856, 1
        %vm870 = vcmp.eq.s32.totalorder %v860, 1
        %vm871 = vcmp.eq.s32.totalorder %v864, 1
        %vm872 = vcmp.eq.s32.totalorder %v868, 1
        %v873 = vsel %vm869, %v821, 0.0
        %v874 = vsel %vm870, %v820, 0.0
        %v875 = vsel %vm871, %v819, 0.0
        %v876 = vsel %vm872, %v818, 0.0
        %v881 = vrot.slane %v873, 4
        %v882 = vrot.slane %v874, 4
        %v883 = vrot.slane %v875, 4
        %v884 = vrot.slane %v876, 4
        %v889 = vsel %vm374, %v805, %v881
        %v890 = vsel %vm374, %v806, %v882
        %v891 = vsel %vm374, %v807, %v883
        %v892 = vsel %vm374, %v808, %v884
        %893 = vst [vmem:[#allocation2 + $0x80] sm:$0xff] %v889
        %894 = vst [vmem:[#allocation2 + $0x88] sm:$0xff] %v890
        %895 = vst [vmem:[#allocation2 + $0x90] sm:$0xff] %v891
        %896 = vst [vmem:[#allocation2 + $0x98] sm:$0xff] %v892
        %897 = vrot.lane.b32.xlu0 %v235, 8
        %v898 = vpop.permute.xlu0 %897
        %899 = vrot.lane.b32.xlu0 %v243, 8
        %v900 = vpop.permute.xlu0 %899
        %901 = vrot.lane.b32.xlu0 %v236, 8
        %v902 = vpop.permute.xlu0 %901
        %903 = vrot.lane.b32.xlu0 %v244, 8
        %v904 = vpop.permute.xlu0 %903
        %vm905 = vcmp.lt.s32.totalorder %v256, 8
        %v906 = vsel %vm905, %v902, %v904
        %v907 = vsel %vm905, %v900, %v902
        %v908 = vsel %vm905, %v898, %v900
        %v909 = vsel %vm905, %v904, %v898
        %v910 = vrot.slane %v532, 2
        %v911 = vrot.slane %v533, 2
        %v912 = vrot.slane %v534, 2
        %v913 = vrot.slane %v535, 2
        %vm914 = vcmp.ne.s32.totalorder %v910, 0
        %vm915 = vcmp.ne.s32.totalorder %v911, 0
        %vm916 = vcmp.ne.s32.totalorder %v912, 0
        %vm917 = vcmp.ne.s32.totalorder %v913, 0
        %v918 = vsel %vm914, 1, 0
        %v919 = vsel %vm915, 1, 0
        %v920 = vsel %vm916, 1, 0
        %v921 = vsel %vm917, 1, 0
        %v922 = vlaneseq
        %v923 = vshrl.u32 %v922, 7
        %v924 = vsub.s32 0, %v923
        %v925 = vrot.slane %v918, %v924
        %v926 = vlaneseq
        %v927 = vshrl.u32 %v926, 7
        %v928 = vsub.s32 0, %v927
        %v929 = vrot.slane %v919, %v928
        %v930 = vlaneseq
        %v931 = vshrl.u32 %v930, 7
        %v932 = vsub.s32 0, %v931
        %v933 = vrot.slane %v920, %v932
        %v934 = vlaneseq
        %v935 = vshrl.u32 %v934, 7
        %v936 = vsub.s32 0, %v935
        %v937 = vrot.slane %v921, %v936
        %vm938 = vcmp.eq.s32.totalorder %v925, 1
        %vm939 = vcmp.eq.s32.totalorder %v929, 1
        %vm940 = vcmp.eq.s32.totalorder %v933, 1
        %vm941 = vcmp.eq.s32.totalorder %v937, 1
        %v942 = vsel %vm938, %v909, 0.0
        %v943 = vsel %vm939, %v908, 0.0
        %v944 = vsel %vm940, %v907, 0.0
        %v945 = vsel %vm941, %v906, 0.0
        %946 = vrot.lane.b32.xlu0 %v235, 7
        %v947 = vpop.permute.xlu0 %946
        %948 = vrot.lane.b32.xlu0 %v243, 7
        %v949 = vpop.permute.xlu0 %948
        %950 = vrot.lane.b32.xlu0 %v236, 7
        %v951 = vpop.permute.xlu0 %950
        %952 = vrot.lane.b32.xlu0 %v244, 7
        %v953 = vpop.permute.xlu0 %952
        %vm954 = vcmp.lt.s32.totalorder %v256, 7
        %v955 = vsel %vm954, %v951, %v953
        %v956 = vsel %vm954, %v949, %v951
        %v957 = vsel %vm954, %v947, %v949
        %v958 = vsel %vm954, %v953, %v947
        %v959 = vshll.u32 %v270, 8
        %v961 = vrot.slane %v959, 7
        %v962 = vrot.slane %v961, 2
        %vm963 = vnez %v962
        %vm964 = vmand %vm238, %vm963
        %v965 = vsel %vm964, 16843009, 0
        %v966 = vunpack.c.0.s8 %v965
        %v967 = vunpack.c.1.s8 %v965
        %v968 = vunpack.c.2.s8 %v965
        %v969 = vunpack.c.3.s8 %v965
        %vm970 = vcmp.ne.s32.totalorder %v966, 0
        %vm971 = vcmp.ne.s32.totalorder %v967, 0
        %vm972 = vcmp.ne.s32.totalorder %v968, 0
        %vm973 = vcmp.ne.s32.totalorder %v969, 0
        %v974 = vsel %vm970, 1, 0
        %v975 = vsel %vm971, 1, 0
        %v976 = vsel %vm972, 1, 0
        %v977 = vsel %vm973, 1, 0
        %v978 = vrot.slane %v974, 2
        %v979 = vrot.slane %v975, 2
        %v980 = vrot.slane %v976, 2
        %v981 = vrot.slane %v977, 2
        %vm982 = vcmp.ne.s32.totalorder %v978, 0
        %vm983 = vcmp.ne.s32.totalorder %v979, 0
        %vm984 = vcmp.ne.s32.totalorder %v980, 0
        %vm985 = vcmp.ne.s32.totalorder %v981, 0
        %v986 = vsel %vm982, 1, 0
        %v987 = vsel %vm983, 1, 0
        %v988 = vsel %vm984, 1, 0
        %v989 = vsel %vm985, 1, 0
        %v990 = vlaneseq
        %v991 = vshrl.u32 %v990, 7
        %v992 = vsub.s32 0, %v991
        %v993 = vrot.slane %v986, %v992
        %v994 = vlaneseq
        %v995 = vshrl.u32 %v994, 7
        %v996 = vsub.s32 0, %v995
        %v997 = vrot.slane %v987, %v996
        %v998 = vlaneseq
        %v999 = vshrl.u32 %v998, 7
        %v1000 = vsub.s32 0, %v999
        %v1001 = vrot.slane %v988, %v1000
        %v1002 = vlaneseq
        %v1003 = vshrl.u32 %v1002, 7
        %v1004 = vsub.s32 0, %v1003
        %v1005 = vrot.slane %v989, %v1004
        %vm1006 = vcmp.eq.s32.totalorder %v993, 1
        %vm1007 = vcmp.eq.s32.totalorder %v997, 1
        %vm1008 = vcmp.eq.s32.totalorder %v1001, 1
        %vm1009 = vcmp.eq.s32.totalorder %v1005, 1
        %v1010 = vsel %vm1006, %v958, 0.0
        %v1011 = vsel %vm1007, %v957, 0.0
        %v1012 = vsel %vm1008, %v956, 0.0
        %v1013 = vsel %vm1009, %v955, 0.0
        %v1018 = vrot.slane %v1010, 4
        %v1019 = vrot.slane %v1011, 4
        %v1020 = vrot.slane %v1012, 4
        %v1021 = vrot.slane %v1013, 4
        %v1026 = vsel %vm374, %v942, %v1018
        %v1027 = vsel %vm374, %v943, %v1019
        %v1028 = vsel %vm374, %v944, %v1020
        %v1029 = vsel %vm374, %v945, %v1021
        %1030 = vst [vmem:[#allocation2 + $0xa0] sm:$0xff] %v1026
        %1031 = vst [vmem:[#allocation2 + $0xa8] sm:$0xff] %v1027
        %1032 = vst [vmem:[#allocation2 + $0xb0] sm:$0xff] %v1028
        %1033 = vst [vmem:[#allocation2 + $0xb8] sm:$0xff] %v1029
        %1034 = vrot.lane.b32.xlu0 %v235, 1
        %v1035 = vpop.permute.xlu0 %1034
        %1036 = vrot.lane.b32.xlu0 %v243, 1
        %v1037 = vpop.permute.xlu0 %1036
        %1038 = vrot.lane.b32.xlu0 %v236, 1
        %v1039 = vpop.permute.xlu0 %1038
        %1040 = vrot.lane.b32.xlu0 %v244, 1
        %v1041 = vpop.permute.xlu0 %1040
        %vm1042 = vcmp.lt.s32.totalorder %v256, 1
        %v1043 = vsel %vm1042, %v1039, %v1041
        %v1044 = vsel %vm1042, %v1037, %v1039
        %v1045 = vsel %vm1042, %v1035, %v1037
        %v1046 = vsel %vm1042, %v1041, %v1035
        %v1047 = vunpack.c.0.s8 %v270
        %v1048 = vunpack.c.1.s8 %v270
        %v1049 = vunpack.c.2.s8 %v270
        %v1050 = vunpack.c.3.s8 %v270
        %vm1051 = vcmp.ne.s32.totalorder %v1047, 0
        %vm1052 = vcmp.ne.s32.totalorder %v1048, 0
        %vm1053 = vcmp.ne.s32.totalorder %v1049, 0
        %vm1054 = vcmp.ne.s32.totalorder %v1050, 0
        %v1055 = vsel %vm1051, 1, 0
        %v1056 = vsel %vm1052, 1, 0
        %v1057 = vsel %vm1053, 1, 0
        %v1058 = vsel %vm1054, 1, 0
        %v1059 = vrot.slane %v1055, 4
        %v1060 = vrot.slane %v1056, 4
        %v1061 = vrot.slane %v1057, 4
        %v1062 = vrot.slane %v1058, 4
        %vm1063 = vcmp.ne.s32.totalorder %v1059, 0
        %vm1064 = vcmp.ne.s32.totalorder %v1060, 0
        %vm1065 = vcmp.ne.s32.totalorder %v1061, 0
        %vm1066 = vcmp.ne.s32.totalorder %v1062, 0
        %v1067 = vsel %vm1063, 1, 0
        %v1068 = vsel %vm1064, 1, 0
        %v1069 = vsel %vm1065, 1, 0
        %v1070 = vsel %vm1066, 1, 0
        %v1071 = vlaneseq
        %v1072 = vshrl.u32 %v1071, 7
        %v1073 = vsub.s32 0, %v1072
        %v1074 = vrot.slane %v1067, %v1073
        %v1075 = vlaneseq
        %v1076 = vshrl.u32 %v1075, 7
        %v1077 = vsub.s32 0, %v1076
        %v1078 = vrot.slane %v1068, %v1077
        %v1079 = vlaneseq
        %v1080 = vshrl.u32 %v1079, 7
        %v1081 = vsub.s32 0, %v1080
        %v1082 = vrot.slane %v1069, %v1081
        %v1083 = vlaneseq
        %v1084 = vshrl.u32 %v1083, 7
        %v1085 = vsub.s32 0, %v1084
        %v1086 = vrot.slane %v1070, %v1085
        %vm1087 = vcmp.eq.s32.totalorder %v1074, 1
        %vm1088 = vcmp.eq.s32.totalorder %v1078, 1
        %vm1089 = vcmp.eq.s32.totalorder %v1082, 1
        %vm1090 = vcmp.eq.s32.totalorder %v1086, 1
        %v1091 = vsel %vm1087, %v1046, 0.0
        %v1092 = vsel %vm1088, %v1045, 0.0
        %v1093 = vsel %vm1089, %v1044, 0.0
        %v1094 = vsel %vm1090, %v1043, 0.0
        %v1095 = vcombine.low %v235, %v235
        %v1096 = vcombine.low %v236, %v236
        %v1099 = vsel %vm374, %v1091, %v1095
        %v1100 = vsel %vm374, %v1092, %v235
        %v1101 = vsel %vm374, %v1093, %v1096
        %v1102 = vsel %vm374, %v1094, %v236
        %1103 = vst [vmem:[#allocation2 + $0xc0] sm:$0xff] %v1099
        %1104 = vst [vmem:[#allocation2 + $0xc8] sm:$0xff] %v1100
        %1105 = vst [vmem:[#allocation2 + $0xd0] sm:$0xff] %v1101
        %1106 = vst [vmem:[#allocation2 + $0xd8] sm:$0xff] %v1102
        %1107 = vrot.lane.b32.xlu0 %v235, 127
        %v1108 = vpop.permute.xlu0 %1107
        %1109 = vrot.lane.b32.xlu0 %v243, 127
        %v1110 = vpop.permute.xlu0 %1109
        %1111 = vrot.lane.b32.xlu0 %v236, 127
        %v1112 = vpop.permute.xlu0 %1111
        %1113 = vrot.lane.b32.xlu0 %v244, 127
        %v1114 = vpop.permute.xlu0 %1113
        %vm1115 = vcmp.lt.s32.totalorder %v256, 127
        %v1116 = vsel %vm1115, %v1112, %v1114
        %v1117 = vsel %vm1115, %v1110, %v1112
        %v1118 = vsel %vm1115, %v1108, %v1110
        %v1119 = vsel %vm1115, %v1114, %v1108
        %v1120 = vrot.slane %v1055, 5
        %v1121 = vrot.slane %v1056, 5
        %v1122 = vrot.slane %v1057, 5
        %v1123 = vrot.slane %v1058, 5
        %vm1124 = vcmp.ne.s32.totalorder %v1120, 0
        %vm1125 = vcmp.ne.s32.totalorder %v1121, 0
        %vm1126 = vcmp.ne.s32.totalorder %v1122, 0
        %vm1127 = vcmp.ne.s32.totalorder %v1123, 0
        %v1128 = vsel %vm1124, 1, 0
        %v1129 = vsel %vm1125, 1, 0
        %v1130 = vsel %vm1126, 1, 0
        %v1131 = vsel %vm1127, 1, 0
        %v1132 = vlaneseq
        %v1133 = vshrl.u32 %v1132, 7
        %v1134 = vsub.s32 0, %v1133
        %v1135 = vrot.slane %v1128, %v1134
        %v1136 = vlaneseq
        %v1137 = vshrl.u32 %v1136, 7
        %v1138 = vsub.s32 0, %v1137
        %v1139 = vrot.slane %v1129, %v1138
        %v1140 = vlaneseq
        %v1141 = vshrl.u32 %v1140, 7
        %v1142 = vsub.s32 0, %v1141
        %v1143 = vrot.slane %v1130, %v1142
        %v1144 = vlaneseq
        %v1145 = vshrl.u32 %v1144, 7
        %v1146 = vsub.s32 0, %v1145
        %v1147 = vrot.slane %v1131, %v1146
        %vm1148 = vcmp.eq.s32.totalorder %v1135, 1
        %vm1149 = vcmp.eq.s32.totalorder %v1139, 1
        %vm1150 = vcmp.eq.s32.totalorder %v1143, 1
        %vm1151 = vcmp.eq.s32.totalorder %v1147, 1
        %v1152 = vsel %vm1148, %v1118, 0.0
        %v1153 = vsel %vm1149, %v1117, 0.0
        %v1154 = vsel %vm1150, %v1116, 0.0
        %v1155 = vsel %vm1151, %v1119, 0.0
        %1156 = vrot.lane.b32.xlu0 %v235, 121
        %v1157 = vpop.permute.xlu0 %1156
        %1158 = vrot.lane.b32.xlu0 %v243, 121
        %v1159 = vpop.permute.xlu0 %1158
        %1160 = vrot.lane.b32.xlu0 %v236, 121
        %v1161 = vpop.permute.xlu0 %1160
        %1162 = vrot.lane.b32.xlu0 %v244, 121
        %v1163 = vpop.permute.xlu0 %1162
        %vm1164 = vcmp.lt.s32.totalorder %v256, 121
        %v1165 = vsel %vm1164, %v1161, %v1163
        %v1166 = vsel %vm1164, %v1159, %v1161
        %v1167 = vsel %vm1164, %v1157, %v1159
        %v1168 = vsel %vm1164, %v1163, %v1157
        %v1169 = vshll.u32 %v270, 24
        %v1171 = vrot.slane %v1169, 7
        %v1172 = vrot.slane %v1171, 2
        %vm1173 = vnez %v1172
        %vm1174 = vmand %vm238, %vm1173
        %v1175 = vsel %vm1174, 16843009, 0
        %v1176 = vunpack.c.0.s8 %v1175
        %v1177 = vunpack.c.1.s8 %v1175
        %v1178 = vunpack.c.2.s8 %v1175
        %v1179 = vunpack.c.3.s8 %v1175
        %vm1180 = vcmp.ne.s32.totalorder %v1176, 0
        %vm1181 = vcmp.ne.s32.totalorder %v1177, 0
        %vm1182 = vcmp.ne.s32.totalorder %v1178, 0
        %vm1183 = vcmp.ne.s32.totalorder %v1179, 0
        %v1184 = vsel %vm1180, 1, 0
        %v1185 = vsel %vm1181, 1, 0
        %v1186 = vsel %vm1182, 1, 0
        %v1187 = vsel %vm1183, 1, 0
        %v1188 = vrot.slane %v1184, 3
        %v1189 = vrot.slane %v1185, 3
        %v1190 = vrot.slane %v1186, 3
        %v1191 = vrot.slane %v1187, 3
        %vm1192 = vcmp.ne.s32.totalorder %v1188, 0
        %vm1193 = vcmp.ne.s32.totalorder %v1189, 0
        %vm1194 = vcmp.ne.s32.totalorder %v1190, 0
        %vm1195 = vcmp.ne.s32.totalorder %v1191, 0
        %v1196 = vsel %vm1192, 1, 0
        %v1197 = vsel %vm1193, 1, 0
        %v1198 = vsel %vm1194, 1, 0
        %v1199 = vsel %vm1195, 1, 0
        %v1200 = vlaneseq
        %v1201 = vshrl.u32 %v1200, 7
        %v1202 = vsub.s32 0, %v1201
        %v1203 = vrot.slane %v1196, %v1202
        %v1204 = vlaneseq
        %v1205 = vshrl.u32 %v1204, 7
        %v1206 = vsub.s32 0, %v1205
        %v1207 = vrot.slane %v1197, %v1206
        %v1208 = vlaneseq
        %v1209 = vshrl.u32 %v1208, 7
        %v1210 = vsub.s32 0, %v1209
        %v1211 = vrot.slane %v1198, %v1210
        %v1212 = vlaneseq
        %v1213 = vshrl.u32 %v1212, 7
        %v1214 = vsub.s32 0, %v1213
        %v1215 = vrot.slane %v1199, %v1214
        %vm1216 = vcmp.eq.s32.totalorder %v1203, 1
        %vm1217 = vcmp.eq.s32.totalorder %v1207, 1
        %vm1218 = vcmp.eq.s32.totalorder %v1211, 1
        %vm1219 = vcmp.eq.s32.totalorder %v1215, 1
        %v1220 = vsel %vm1216, %v1167, 0.0
        %v1221 = vsel %vm1217, %v1166, 0.0
        %v1222 = vsel %vm1218, %v1165, 0.0
        %v1223 = vsel %vm1219, %v1168, 0.0
        %v1228 = vrot.slane %v1220, 4
        %v1229 = vrot.slane %v1221, 4
        %v1230 = vrot.slane %v1222, 4
        %v1231 = vrot.slane %v1223, 4
        %v1236 = vsel %vm374, %v1152, %v1228
        %v1237 = vsel %vm374, %v1153, %v1229
        %v1238 = vsel %vm374, %v1154, %v1230
        %v1239 = vsel %vm374, %v1155, %v1231
        %1240 = vst [vmem:[#allocation2 + $0xe0] sm:$0xff] %v1236
        %1241 = vst [vmem:[#allocation2 + $0xe8] sm:$0xff] %v1237
        %1242 = vst [vmem:[#allocation2 + $0xf0] sm:$0xff] %v1238
        %1243 = vst [vmem:[#allocation2 + $0xf8] sm:$0xff] %v1239
        %1244 = vrot.lane.b32.xlu0 %v235, 120
        %v1245 = vpop.permute.xlu0 %1244
        %1246 = vrot.lane.b32.xlu0 %v243, 120
        %v1247 = vpop.permute.xlu0 %1246
        %1248 = vrot.lane.b32.xlu0 %v236, 120
        %v1249 = vpop.permute.xlu0 %1248
        %1250 = vrot.lane.b32.xlu0 %v244, 120
        %v1251 = vpop.permute.xlu0 %1250
        %vm1252 = vcmp.lt.s32.totalorder %v256, 120
        %v1253 = vsel %vm1252, %v1249, %v1251
        %v1254 = vsel %vm1252, %v1247, %v1249
        %v1255 = vsel %vm1252, %v1245, %v1247
        %v1256 = vsel %vm1252, %v1251, %v1245
        %v1257 = vrot.slane %v532, 3
        %v1258 = vrot.slane %v533, 3
        %v1259 = vrot.slane %v534, 3
        %v1260 = vrot.slane %v535, 3
        %vm1261 = vcmp.ne.s32.totalorder %v1257, 0
        %vm1262 = vcmp.ne.s32.totalorder %v1258, 0
        %vm1263 = vcmp.ne.s32.totalorder %v1259, 0
        %vm1264 = vcmp.ne.s32.totalorder %v1260, 0
        %v1265 = vsel %vm1261, 1, 0
        %v1266 = vsel %vm1262, 1, 0
        %v1267 = vsel %vm1263, 1, 0
        %v1268 = vsel %vm1264, 1, 0
        %v1269 = vlaneseq
        %v1270 = vshrl.u32 %v1269, 7
        %v1271 = vsub.s32 0, %v1270
        %v1272 = vrot.slane %v1265, %v1271
        %v1273 = vlaneseq
        %v1274 = vshrl.u32 %v1273, 7
        %v1275 = vsub.s32 0, %v1274
        %v1276 = vrot.slane %v1266, %v1275
        %v1277 = vlaneseq
        %v1278 = vshrl.u32 %v1277, 7
        %v1279 = vsub.s32 0, %v1278
        %v1280 = vrot.slane %v1267, %v1279
        %v1281 = vlaneseq
        %v1282 = vshrl.u32 %v1281, 7
        %v1283 = vsub.s32 0, %v1282
        %v1284 = vrot.slane %v1268, %v1283
        %vm1285 = vcmp.eq.s32.totalorder %v1272, 1
        %vm1286 = vcmp.eq.s32.totalorder %v1276, 1
        %vm1287 = vcmp.eq.s32.totalorder %v1280, 1
        %vm1288 = vcmp.eq.s32.totalorder %v1284, 1
        %v1289 = vsel %vm1285, %v1255, 0.0
        %v1290 = vsel %vm1286, %v1254, 0.0
        %v1291 = vsel %vm1287, %v1253, 0.0
        %v1292 = vsel %vm1288, %v1256, 0.0
        %1293 = vrot.lane.b32.xlu0 %v235, 119
        %v1294 = vpop.permute.xlu0 %1293
        %1295 = vrot.lane.b32.xlu0 %v243, 119
        %v1296 = vpop.permute.xlu0 %1295
        %1297 = vrot.lane.b32.xlu0 %v236, 119
        %v1298 = vpop.permute.xlu0 %1297
        %1299 = vrot.lane.b32.xlu0 %v244, 119
        %v1300 = vpop.permute.xlu0 %1299
        %vm1301 = vcmp.lt.s32.totalorder %v256, 119
        %v1302 = vsel %vm1301, %v1298, %v1300
        %v1303 = vsel %vm1301, %v1296, %v1298
        %v1304 = vsel %vm1301, %v1294, %v1296
        %v1305 = vsel %vm1301, %v1300, %v1294
        %v1306 = vrot.slane %v837, 3
        %v1307 = vrot.slane %v838, 3
        %v1308 = vrot.slane %v839, 3
        %v1309 = vrot.slane %v840, 3
        %vm1310 = vcmp.ne.s32.totalorder %v1306, 0
        %vm1311 = vcmp.ne.s32.totalorder %v1307, 0
        %vm1312 = vcmp.ne.s32.totalorder %v1308, 0
        %vm1313 = vcmp.ne.s32.totalorder %v1309, 0
        %v1314 = vsel %vm1310, 1, 0
        %v1315 = vsel %vm1311, 1, 0
        %v1316 = vsel %vm1312, 1, 0
        %v1317 = vsel %vm1313, 1, 0
        %v1318 = vlaneseq
        %v1319 = vshrl.u32 %v1318, 7
        %v1320 = vsub.s32 0, %v1319
        %v1321 = vrot.slane %v1314, %v1320
        %v1322 = vlaneseq
        %v1323 = vshrl.u32 %v1322, 7
        %v1324 = vsub.s32 0, %v1323
        %v1325 = vrot.slane %v1315, %v1324
        %v1326 = vlaneseq
        %v1327 = vshrl.u32 %v1326, 7
        %v1328 = vsub.s32 0, %v1327
        %v1329 = vrot.slane %v1316, %v1328
        %v1330 = vlaneseq
        %v1331 = vshrl.u32 %v1330, 7
        %v1332 = vsub.s32 0, %v1331
        %v1333 = vrot.slane %v1317, %v1332
        %vm1334 = vcmp.eq.s32.totalorder %v1321, 1
        %vm1335 = vcmp.eq.s32.totalorder %v1325, 1
        %vm1336 = vcmp.eq.s32.totalorder %v1329, 1
        %vm1337 = vcmp.eq.s32.totalorder %v1333, 1
        %v1338 = vsel %vm1334, %v1304, 0.0
        %v1339 = vsel %vm1335, %v1303, 0.0
        %v1340 = vsel %vm1336, %v1302, 0.0
        %v1341 = vsel %vm1337, %v1305, 0.0
        %v1346 = vrot.slane %v1338, 4
        %v1347 = vrot.slane %v1339, 4
        %v1348 = vrot.slane %v1340, 4
        %v1349 = vrot.slane %v1341, 4
        %v1354 = vsel %vm374, %v1289, %v1346
        %v1355 = vsel %vm374, %v1290, %v1347
        %v1356 = vsel %vm374, %v1291, %v1348
        %v1357 = vsel %vm374, %v1292, %v1349
        %1358 = vst [vmem:[#allocation2 + $0x100] sm:$0xff] %v1354
        %1359 = vst [vmem:[#allocation2 + $0x108] sm:$0xff] %v1355
        %1360 = vst [vmem:[#allocation2 + $0x110] sm:$0xff] %v1356
        %1361 = vst [vmem:[#allocation2 + $0x118] sm:$0xff] %v1357
        %v1362 = vshrl.u32 %v262, 8
        %v1364 = vrot.slane %v1362, 6
        %v1365 = vrot.slane %v1364, 2
        %vm1366 = vnez %v1365
        %vm1367 = vmand %vm238, %vm1366
        %vm1368 = vmand %vm1367, %vm963
        %v1369 = vsel %vm1368, 16843009, 0
        %v1370 = vunpack.c.0.s8 %v1369
        %v1371 = vunpack.c.1.s8 %v1369
        %v1372 = vunpack.c.2.s8 %v1369
        %v1373 = vunpack.c.3.s8 %v1369
        %vm1374 = vcmp.ne.s32.totalorder %v1370, 0
        %vm1375 = vcmp.ne.s32.totalorder %v1371, 0
        %vm1376 = vcmp.ne.s32.totalorder %v1372, 0
        %vm1377 = vcmp.ne.s32.totalorder %v1373, 0
        %v1378 = vsel %vm1374, 1, 0
        %v1379 = vsel %vm1375, 1, 0
        %v1380 = vsel %vm1376, 1, 0
        %v1381 = vsel %vm1377, 1, 0
        %v1382 = vrot.slane %v1378, 1
        %v1383 = vrot.slane %v1379, 1
        %v1384 = vrot.slane %v1380, 1
        %v1385 = vrot.slane %v1381, 1
        %vm1386 = vcmp.ne.s32.totalorder %v1382, 0
        %vm1387 = vcmp.ne.s32.totalorder %v1383, 0
        %vm1388 = vcmp.ne.s32.totalorder %v1384, 0
        %vm1389 = vcmp.ne.s32.totalorder %v1385, 0
        %v1390 = vsel %vm1386, 1, 0
        %v1391 = vsel %vm1387, 1, 0
        %v1392 = vsel %vm1388, 1, 0
        %v1393 = vsel %vm1389, 1, 0
        %v1394 = vlaneseq
        %v1395 = vshrl.u32 %v1394, 7
        %v1396 = vsub.s32 0, %v1395
        %v1397 = vrot.slane %v1390, %v1396
        %v1398 = vlaneseq
        %v1399 = vshrl.u32 %v1398, 7
        %v1400 = vsub.s32 0, %v1399
        %v1401 = vrot.slane %v1391, %v1400
        %v1402 = vlaneseq
        %v1403 = vshrl.u32 %v1402, 7
        %v1404 = vsub.s32 0, %v1403
        %v1405 = vrot.slane %v1392, %v1404
        %v1406 = vlaneseq
        %v1407 = vshrl.u32 %v1406, 7
        %v1408 = vsub.s32 0, %v1407
        %v1409 = vrot.slane %v1393, %v1408
        %vm1410 = vcmp.eq.s32.totalorder %v1397, 1
        %vm1411 = vcmp.eq.s32.totalorder %v1401, 1
        %vm1412 = vcmp.eq.s32.totalorder %v1405, 1
        %vm1413 = vcmp.eq.s32.totalorder %v1409, 1
        %v1414 = vsel %vm1410, %v260, 0.0
        %v1415 = vsel %vm1411, %v259, 0.0
        %v1416 = vsel %vm1412, %v258, 0.0
        %v1417 = vsel %vm1413, %v261, 0.0
        %v1418 = vsel %vm1367, 16843009, 0
        %v1419 = vunpack.c.0.s8 %v1418
        %v1420 = vunpack.c.1.s8 %v1418
        %v1421 = vunpack.c.2.s8 %v1418
        %v1422 = vunpack.c.3.s8 %v1418
        %vm1423 = vcmp.ne.s32.totalorder %v1419, 0
        %vm1424 = vcmp.ne.s32.totalorder %v1420, 0
        %vm1425 = vcmp.ne.s32.totalorder %v1421, 0
        %vm1426 = vcmp.ne.s32.totalorder %v1422, 0
        %v1427 = vsel %vm1423, 1, 0
        %v1428 = vsel %vm1424, 1, 0
        %v1429 = vsel %vm1425, 1, 0
        %v1430 = vsel %vm1426, 1, 0
        %v1431 = vrot.slane %v1427, 1
        %v1432 = vrot.slane %v1428, 1
        %v1433 = vrot.slane %v1429, 1
        %v1434 = vrot.slane %v1430, 1
        %vm1435 = vcmp.ne.s32.totalorder %v1431, 0
        %vm1436 = vcmp.ne.s32.totalorder %v1432, 0
        %vm1437 = vcmp.ne.s32.totalorder %v1433, 0
        %vm1438 = vcmp.ne.s32.totalorder %v1434, 0
        %v1439 = vsel %vm1435, 1, 0
        %v1440 = vsel %vm1436, 1, 0
        %v1441 = vsel %vm1437, 1, 0
        %v1442 = vsel %vm1438, 1, 0
        %v1443 = vlaneseq
        %v1444 = vshrl.u32 %v1443, 7
        %v1445 = vsub.s32 0, %v1444
        %v1446 = vrot.slane %v1439, %v1445
        %v1447 = vlaneseq
        %v1448 = vshrl.u32 %v1447, 7
        %v1449 = vsub.s32 0, %v1448
        %v1450 = vrot.slane %v1440, %v1449
        %v1451 = vlaneseq
        %v1452 = vshrl.u32 %v1451, 7
        %v1453 = vsub.s32 0, %v1452
        %v1454 = vrot.slane %v1441, %v1453
        %v1455 = vlaneseq
        %v1456 = vshrl.u32 %v1455, 7
        %v1457 = vsub.s32 0, %v1456
        %v1458 = vrot.slane %v1442, %v1457
        %vm1459 = vcmp.eq.s32.totalorder %v1446, 1
        %vm1460 = vcmp.eq.s32.totalorder %v1450, 1
        %vm1461 = vcmp.eq.s32.totalorder %v1454, 1
        %vm1462 = vcmp.eq.s32.totalorder %v1458, 1
        %v1463 = vsel %vm1459, %v323, 0.0
        %v1464 = vsel %vm1460, %v322, 0.0
        %v1465 = vsel %vm1461, %v321, 0.0
        %v1466 = vsel %vm1462, %v324, 0.0
        %v1471 = vrot.slane %v1463, 4
        %v1472 = vrot.slane %v1464, 4
        %v1473 = vrot.slane %v1465, 4
        %v1474 = vrot.slane %v1466, 4
        %v1479 = vsel %vm374, %v1414, %v1471
        %v1480 = vsel %vm374, %v1415, %v1472
        %v1481 = vsel %vm374, %v1416, %v1473
        %v1482 = vsel %vm374, %v1417, %v1474
        %1483 = vst [vmem:[#allocation2 + $0x120] sm:$0xff] %v1479
        %1484 = vst [vmem:[#allocation2 + $0x128] sm:$0xff] %v1480
        %1485 = vst [vmem:[#allocation2 + $0x130] sm:$0xff] %v1481
        %1486 = vst [vmem:[#allocation2 + $0x138] sm:$0xff] %v1482
        %vm1487 = vmand %vm1367, %vm273
        %v1488 = vsel %vm1487, 16843009, 0
        %v1489 = vunpack.c.0.s8 %v1488
        %v1490 = vunpack.c.1.s8 %v1488
        %v1491 = vunpack.c.2.s8 %v1488
        %v1492 = vunpack.c.3.s8 %v1488
        %vm1493 = vcmp.ne.s32.totalorder %v1489, 0
        %vm1494 = vcmp.ne.s32.totalorder %v1490, 0
        %vm1495 = vcmp.ne.s32.totalorder %v1491, 0
        %vm1496 = vcmp.ne.s32.totalorder %v1492, 0
        %v1497 = vsel %vm1493, 1, 0
        %v1498 = vsel %vm1494, 1, 0
        %v1499 = vsel %vm1495, 1, 0
        %v1500 = vsel %vm1496, 1, 0
        %v1501 = vrot.slane %v1497, 1
        %v1502 = vrot.slane %v1498, 1
        %v1503 = vrot.slane %v1499, 1
        %v1504 = vrot.slane %v1500, 1
        %vm1505 = vcmp.ne.s32.totalorder %v1501, 0
        %vm1506 = vcmp.ne.s32.totalorder %v1502, 0
        %vm1507 = vcmp.ne.s32.totalorder %v1503, 0
        %vm1508 = vcmp.ne.s32.totalorder %v1504, 0
        %v1509 = vsel %vm1505, 1, 0
        %v1510 = vsel %vm1506, 1, 0
        %v1511 = vsel %vm1507, 1, 0
        %v1512 = vsel %vm1508, 1, 0
        %v1513 = vlaneseq
        %v1514 = vshrl.u32 %v1513, 7
        %v1515 = vsub.s32 0, %v1514
        %v1516 = vrot.slane %v1509, %v1515
        %v1517 = vlaneseq
        %v1518 = vshrl.u32 %v1517, 7
        %v1519 = vsub.s32 0, %v1518
        %v1520 = vrot.slane %v1510, %v1519
        %v1521 = vlaneseq
        %v1522 = vshrl.u32 %v1521, 7
        %v1523 = vsub.s32 0, %v1522
        %v1524 = vrot.slane %v1511, %v1523
        %v1525 = vlaneseq
        %v1526 = vshrl.u32 %v1525, 7
        %v1527 = vsub.s32 0, %v1526
        %v1528 = vrot.slane %v1512, %v1527
        %vm1529 = vcmp.eq.s32.totalorder %v1516, 1
        %vm1530 = vcmp.eq.s32.totalorder %v1520, 1
        %vm1531 = vcmp.eq.s32.totalorder %v1524, 1
        %vm1532 = vcmp.eq.s32.totalorder %v1528, 1
        %v1533 = vsel %vm1529, %v394, 0.0
        %v1534 = vsel %vm1530, %v393, 0.0
        %v1535 = vsel %vm1531, %v392, 0.0
        %v1536 = vsel %vm1532, %v395, 0.0
        %v1537 = vrot.slane %v974, 1
        %v1538 = vrot.slane %v975, 1
        %v1539 = vrot.slane %v976, 1
        %v1540 = vrot.slane %v977, 1
        %vm1541 = vcmp.ne.s32.totalorder %v1537, 0
        %vm1542 = vcmp.ne.s32.totalorder %v1538, 0
        %vm1543 = vcmp.ne.s32.totalorder %v1539, 0
        %vm1544 = vcmp.ne.s32.totalorder %v1540, 0
        %v1545 = vsel %vm1541, 1, 0
        %v1546 = vsel %vm1542, 1, 0
        %v1547 = vsel %vm1543, 1, 0
        %v1548 = vsel %vm1544, 1, 0
        %v1549 = vlaneseq
        %v1550 = vshrl.u32 %v1549, 7
        %v1551 = vsub.s32 0, %v1550
        %v1552 = vrot.slane %v1545, %v1551
        %v1553 = vlaneseq
        %v1554 = vshrl.u32 %v1553, 7
        %v1555 = vsub.s32 0, %v1554
        %v1556 = vrot.slane %v1546, %v1555
        %v1557 = vlaneseq
        %v1558 = vshrl.u32 %v1557, 7
        %v1559 = vsub.s32 0, %v1558
        %v1560 = vrot.slane %v1547, %v1559
        %v1561 = vlaneseq
        %v1562 = vshrl.u32 %v1561, 7
        %v1563 = vsub.s32 0, %v1562
        %v1564 = vrot.slane %v1548, %v1563
        %vm1565 = vcmp.eq.s32.totalorder %v1552, 1
        %vm1566 = vcmp.eq.s32.totalorder %v1556, 1
        %vm1567 = vcmp.eq.s32.totalorder %v1560, 1
        %vm1568 = vcmp.eq.s32.totalorder %v1564, 1
        %v1569 = vsel %vm1565, %v451, 0.0
        %v1570 = vsel %vm1566, %v450, 0.0
        %v1571 = vsel %vm1567, %v449, 0.0
        %v1572 = vsel %vm1568, %v452, 0.0
        %v1577 = vrot.slane %v1569, 4
        %v1578 = vrot.slane %v1570, 4
        %v1579 = vrot.slane %v1571, 4
        %v1580 = vrot.slane %v1572, 4
        %v1585 = vsel %vm374, %v1533, %v1577
        %v1586 = vsel %vm374, %v1534, %v1578
        %v1587 = vsel %vm374, %v1535, %v1579
        %v1588 = vsel %vm374, %v1536, %v1580
        %1589 = vst [vmem:[#allocation2 + $0x140] sm:$0xff] %v1585
        %1590 = vst [vmem:[#allocation2 + $0x148] sm:$0xff] %v1586
        %1591 = vst [vmem:[#allocation2 + $0x150] sm:$0xff] %v1587
        %1592 = vst [vmem:[#allocation2 + $0x158] sm:$0xff] %v1588
        %v1593 = vrot.slane %v532, 1
        %v1594 = vrot.slane %v533, 1
        %v1595 = vrot.slane %v534, 1
        %v1596 = vrot.slane %v535, 1
        %vm1597 = vcmp.ne.s32.totalorder %v1593, 0
        %vm1598 = vcmp.ne.s32.totalorder %v1594, 0
        %vm1599 = vcmp.ne.s32.totalorder %v1595, 0
        %vm1600 = vcmp.ne.s32.totalorder %v1596, 0
        %v1601 = vsel %vm1597, 1, 0
        %v1602 = vsel %vm1598, 1, 0
        %v1603 = vsel %vm1599, 1, 0
        %v1604 = vsel %vm1600, 1, 0
        %v1605 = vlaneseq
        %v1606 = vshrl.u32 %v1605, 7
        %v1607 = vsub.s32 0, %v1606
        %v1608 = vrot.slane %v1601, %v1607
        %v1609 = vlaneseq
        %v1610 = vshrl.u32 %v1609, 7
        %v1611 = vsub.s32 0, %v1610
        %v1612 = vrot.slane %v1602, %v1611
        %v1613 = vlaneseq
        %v1614 = vshrl.u32 %v1613, 7
        %v1615 = vsub.s32 0, %v1614
        %v1616 = vrot.slane %v1603, %v1615
        %v1617 = vlaneseq
        %v1618 = vshrl.u32 %v1617, 7
        %v1619 = vsub.s32 0, %v1618
        %v1620 = vrot.slane %v1604, %v1619
        %vm1621 = vcmp.eq.s32.totalorder %v1608, 1
        %vm1622 = vcmp.eq.s32.totalorder %v1612, 1
        %vm1623 = vcmp.eq.s32.totalorder %v1616, 1
        %vm1624 = vcmp.eq.s32.totalorder %v1620, 1
        %v1625 = vsel %vm1621, %v522, 0.0
        %v1626 = vsel %vm1622, %v521, 0.0
        %v1627 = vsel %vm1623, %v520, 0.0
        %v1628 = vsel %vm1624, %v523, 0.0
        %v1629 = vrot.slane %v463, 1
        %v1630 = vrot.slane %v464, 1
        %v1631 = vrot.slane %v465, 1
        %v1632 = vrot.slane %v466, 1
        %vm1633 = vcmp.ne.s32.totalorder %v1629, 0
        %vm1634 = vcmp.ne.s32.totalorder %v1630, 0
        %vm1635 = vcmp.ne.s32.totalorder %v1631, 0
        %vm1636 = vcmp.ne.s32.totalorder %v1632, 0
        %v1637 = vsel %vm1633, 1, 0
        %v1638 = vsel %vm1634, 1, 0
        %v1639 = vsel %vm1635, 1, 0
        %v1640 = vsel %vm1636, 1, 0
        %v1641 = vlaneseq
        %v1642 = vshrl.u32 %v1641, 7
        %v1643 = vsub.s32 0, %v1642
        %v1644 = vrot.slane %v1637, %v1643
        %v1645 = vlaneseq
        %v1646 = vshrl.u32 %v1645, 7
        %v1647 = vsub.s32 0, %v1646
        %v1648 = vrot.slane %v1638, %v1647
        %v1649 = vlaneseq
        %v1650 = vshrl.u32 %v1649, 7
        %v1651 = vsub.s32 0, %v1650
        %v1652 = vrot.slane %v1639, %v1651
        %v1653 = vlaneseq
        %v1654 = vshrl.u32 %v1653, 7
        %v1655 = vsub.s32 0, %v1654
        %v1656 = vrot.slane %v1640, %v1655
        %vm1657 = vcmp.eq.s32.totalorder %v1644, 1
        %vm1658 = vcmp.eq.s32.totalorder %v1648, 1
        %vm1659 = vcmp.eq.s32.totalorder %v1652, 1
        %vm1660 = vcmp.eq.s32.totalorder %v1656, 1
        %v1661 = vsel %vm1657, %v571, 0.0
        %v1662 = vsel %vm1658, %v570, 0.0
        %v1663 = vsel %vm1659, %v569, 0.0
        %v1664 = vsel %vm1660, %v572, 0.0
        %v1669 = vrot.slane %v1661, 4
        %v1670 = vrot.slane %v1662, 4
        %v1671 = vrot.slane %v1663, 4
        %v1672 = vrot.slane %v1664, 4
        %v1677 = vsel %vm374, %v1625, %v1669
        %v1678 = vsel %vm374, %v1626, %v1670
        %v1679 = vsel %vm374, %v1627, %v1671
        %v1680 = vsel %vm374, %v1628, %v1672
        %1681 = vst [vmem:[#allocation2 + $0x160] sm:$0xff] %v1677
        %1682 = vst [vmem:[#allocation2 + $0x168] sm:$0xff] %v1678
        %1683 = vst [vmem:[#allocation2 + $0x170] sm:$0xff] %v1679
        %1684 = vst [vmem:[#allocation2 + $0x178] sm:$0xff] %v1680
        %vm1685 = vmand %vm269, %vm963
        %v1686 = vsel %vm1685, 16843009, 0
        %v1687 = vunpack.c.0.s8 %v1686
        %v1688 = vunpack.c.1.s8 %v1686
        %v1689 = vunpack.c.2.s8 %v1686
        %v1690 = vunpack.c.3.s8 %v1686
        %vm1691 = vcmp.ne.s32.totalorder %v1687, 0
        %vm1692 = vcmp.ne.s32.totalorder %v1688, 0
        %vm1693 = vcmp.ne.s32.totalorder %v1689, 0
        %vm1694 = vcmp.ne.s32.totalorder %v1690, 0
        %v1695 = vsel %vm1691, 1, 0
        %v1696 = vsel %vm1692, 1, 0
        %v1697 = vsel %vm1693, 1, 0
        %v1698 = vsel %vm1694, 1, 0
        %v1699 = vrot.slane %v1695, 1
        %v1700 = vrot.slane %v1696, 1
        %v1701 = vrot.slane %v1697, 1
        %v1702 = vrot.slane %v1698, 1
        %vm1703 = vcmp.ne.s32.totalorder %v1699, 0
        %vm1704 = vcmp.ne.s32.totalorder %v1700, 0
        %vm1705 = vcmp.ne.s32.totalorder %v1701, 0
        %vm1706 = vcmp.ne.s32.totalorder %v1702, 0
        %v1707 = vsel %vm1703, 1, 0
        %v1708 = vsel %vm1704, 1, 0
        %v1709 = vsel %vm1705, 1, 0
        %v1710 = vsel %vm1706, 1, 0
        %v1711 = vlaneseq
        %v1712 = vshrl.u32 %v1711, 7
        %v1713 = vsub.s32 0, %v1712
        %v1714 = vrot.slane %v1707, %v1713
        %v1715 = vlaneseq
        %v1716 = vshrl.u32 %v1715, 7
        %v1717 = vsub.s32 0, %v1716
        %v1718 = vrot.slane %v1708, %v1717
        %v1719 = vlaneseq
        %v1720 = vshrl.u32 %v1719, 7
        %v1721 = vsub.s32 0, %v1720
        %v1722 = vrot.slane %v1709, %v1721
        %v1723 = vlaneseq
        %v1724 = vshrl.u32 %v1723, 7
        %v1725 = vsub.s32 0, %v1724
        %v1726 = vrot.slane %v1710, %v1725
        %vm1727 = vcmp.eq.s32.totalorder %v1714, 1
        %vm1728 = vcmp.eq.s32.totalorder %v1718, 1
        %vm1729 = vcmp.eq.s32.totalorder %v1722, 1
        %vm1730 = vcmp.eq.s32.totalorder %v1726, 1
        %v1731 = vsel %vm1727, %v642, 0.0
        %v1732 = vsel %vm1728, %v641, 0.0
        %v1733 = vsel %vm1729, %v640, 0.0
        %v1734 = vsel %vm1730, %v643, 0.0
        %v1735 = vrot.slane %v334, 1
        %v1736 = vrot.slane %v335, 1
        %v1737 = vrot.slane %v336, 1
        %v1738 = vrot.slane %v337, 1
        %vm1739 = vcmp.ne.s32.totalorder %v1735, 0
        %vm1740 = vcmp.ne.s32.totalorder %v1736, 0
        %vm1741 = vcmp.ne.s32.totalorder %v1737, 0
        %vm1742 = vcmp.ne.s32.totalorder %v1738, 0
        %v1743 = vsel %vm1739, 1, 0
        %v1744 = vsel %vm1740, 1, 0
        %v1745 = vsel %vm1741, 1, 0
        %v1746 = vsel %vm1742, 1, 0
        %v1747 = vlaneseq
        %v1748 = vshrl.u32 %v1747, 7
        %v1749 = vsub.s32 0, %v1748
        %v1750 = vrot.slane %v1743, %v1749
        %v1751 = vlaneseq
        %v1752 = vshrl.u32 %v1751, 7
        %v1753 = vsub.s32 0, %v1752
        %v1754 = vrot.slane %v1744, %v1753
        %v1755 = vlaneseq
        %v1756 = vshrl.u32 %v1755, 7
        %v1757 = vsub.s32 0, %v1756
        %v1758 = vrot.slane %v1745, %v1757
        %v1759 = vlaneseq
        %v1760 = vshrl.u32 %v1759, 7
        %v1761 = vsub.s32 0, %v1760
        %v1762 = vrot.slane %v1746, %v1761
        %vm1763 = vcmp.eq.s32.totalorder %v1750, 1
        %vm1764 = vcmp.eq.s32.totalorder %v1754, 1
        %vm1765 = vcmp.eq.s32.totalorder %v1758, 1
        %vm1766 = vcmp.eq.s32.totalorder %v1762, 1
        %v1767 = vsel %vm1763, %v699, 0.0
        %v1768 = vsel %vm1764, %v698, 0.0
        %v1769 = vsel %vm1765, %v697, 0.0
        %v1770 = vsel %vm1766, %v700, 0.0
        %v1775 = vrot.slane %v1767, 4
        %v1776 = vrot.slane %v1768, 4
        %v1777 = vrot.slane %v1769, 4
        %v1778 = vrot.slane %v1770, 4
        %v1783 = vsel %vm374, %v1731, %v1775
        %v1784 = vsel %vm374, %v1732, %v1776
        %v1785 = vsel %vm374, %v1733, %v1777
        %v1786 = vsel %vm374, %v1734, %v1778
        %1787 = vst [vmem:[#allocation2 + $0x180] sm:$0xff] %v1783
        %1788 = vst [vmem:[#allocation2 + $0x188] sm:$0xff] %v1784
        %1789 = vst [vmem:[#allocation2 + $0x190] sm:$0xff] %v1785
        %1790 = vst [vmem:[#allocation2 + $0x198] sm:$0xff] %v1786
        %v1791 = vrot.slane %v284, 1
        %v1792 = vrot.slane %v285, 1
        %v1793 = vrot.slane %v286, 1
        %v1794 = vrot.slane %v287, 1
        %vm1795 = vcmp.ne.s32.totalorder %v1791, 0
        %vm1796 = vcmp.ne.s32.totalorder %v1792, 0
        %vm1797 = vcmp.ne.s32.totalorder %v1793, 0
        %vm1798 = vcmp.ne.s32.totalorder %v1794, 0
        %v1799 = vsel %vm1795, 1, 0
        %v1800 = vsel %vm1796, 1, 0
        %v1801 = vsel %vm1797, 1, 0
        %v1802 = vsel %vm1798, 1, 0
        %v1803 = vlaneseq
        %v1804 = vshrl.u32 %v1803, 7
        %v1805 = vsub.s32 0, %v1804
        %v1806 = vrot.slane %v1799, %v1805
        %v1807 = vlaneseq
        %v1808 = vshrl.u32 %v1807, 7
        %v1809 = vsub.s32 0, %v1808
        %v1810 = vrot.slane %v1800, %v1809
        %v1811 = vlaneseq
        %v1812 = vshrl.u32 %v1811, 7
        %v1813 = vsub.s32 0, %v1812
        %v1814 = vrot.slane %v1801, %v1813
        %v1815 = vlaneseq
        %v1816 = vshrl.u32 %v1815, 7
        %v1817 = vsub.s32 0, %v1816
        %v1818 = vrot.slane %v1802, %v1817
        %vm1819 = vcmp.eq.s32.totalorder %v1806, 1
        %vm1820 = vcmp.eq.s32.totalorder %v1810, 1
        %vm1821 = vcmp.eq.s32.totalorder %v1814, 1
        %vm1822 = vcmp.eq.s32.totalorder %v1818, 1
        %v1823 = vsel %vm1819, %v769, 0.0
        %v1824 = vsel %vm1820, %v768, 0.0
        %v1825 = vsel %vm1821, %v767, 0.0
        %v1826 = vsel %vm1822, %v770, 0.0
        %1827 = vst [vmem:[#allocation2 + $0x1a0] sm:$0xf] %v1823
        %1828 = vst [vmem:[#allocation2 + $0x1a8] sm:$0xf] %v1824
        %1829 = vst [vmem:[#allocation2 + $0x1b0] sm:$0xf] %v1825
        %1830 = vst [vmem:[#allocation2 + $0x1b8] sm:$0xf] %v1826
        %v1831 = vld [vmem:[#allocation8] sm:$0xff]
        %v1832 = vld [vmem:[#allocation2] sm:$0xff]
        %v1833 = vld [vmem:[#allocation2 + $0x8] sm:$0xff]
        %v1834 = vld [vmem:[#allocation2 + $0x10] sm:$0xff]
        %v1835 = vld [vmem:[#allocation2 + $0x18] sm:$0xff]
        %v1836 = vld [vmem:[#allocation2 + $0x20] sm:$0xff]
        %v1837 = vld [vmem:[#allocation2 + $0x28] sm:$0xff]
        %v1838 = vld [vmem:[#allocation2 + $0x30] sm:$0xff]
        %v1839 = vld [vmem:[#allocation2 + $0x38] sm:$0xff]
        %v1840 = vld [vmem:[#allocation2 + $0x40] sm:$0xff]
        %v1841 = vld [vmem:[#allocation2 + $0x48] sm:$0xff]
        %v1842 = vld [vmem:[#allocation2 + $0x50] sm:$0xff]
        %v1843 = vld [vmem:[#allocation2 + $0x58] sm:$0xff]
        %v1844 = vld [vmem:[#allocation2 + $0x60] sm:$0xff]
        %v1845 = vld [vmem:[#allocation2 + $0x68] sm:$0xff]
        %v1846 = vld [vmem:[#allocation2 + $0x70] sm:$0xff]
        %v1847 = vld [vmem:[#allocation2 + $0x78] sm:$0xff]
        %v1848 = vld [vmem:[#allocation2 + $0x80] sm:$0xff]
        %v1849 = vld [vmem:[#allocation2 + $0x88] sm:$0xff]
        %v1850 = vld [vmem:[#allocation2 + $0x90] sm:$0xff]
        %v1851 = vld [vmem:[#allocation2 + $0x98] sm:$0xff]
        %v1852 = vld [vmem:[#allocation2 + $0xa0] sm:$0xff]
        %v1853 = vld [vmem:[#allocation2 + $0xa8] sm:$0xff]
        %v1854 = vld [vmem:[#allocation2 + $0xb0] sm:$0xff]
        %v1855 = vld [vmem:[#allocation2 + $0xb8] sm:$0xff]
        %v1856 = vld [vmem:[#allocation2 + $0xc0] sm:$0xff]
        %v1857 = vld [vmem:[#allocation2 + $0xc8] sm:$0xff]
        %v1858 = vld [vmem:[#allocation2 + $0xd0] sm:$0xff]
        %v1859 = vld [vmem:[#allocation2 + $0xd8] sm:$0xff]
        %v1860 = vld [vmem:[#allocation2 + $0xe0] sm:$0xff]
        %v1861 = vld [vmem:[#allocation2 + $0xe8] sm:$0xff]
        %v1862 = vld [vmem:[#allocation2 + $0xf0] sm:$0xff]
        %v1863 = vld [vmem:[#allocation2 + $0xf8] sm:$0xff]
        %v1864 = vld [vmem:[#allocation2 + $0x100] sm:$0xff]
        %v1865 = vld [vmem:[#allocation2 + $0x108] sm:$0xff]
        %v1866 = vld [vmem:[#allocation2 + $0x110] sm:$0xff]
        %v1867 = vld [vmem:[#allocation2 + $0x118] sm:$0xff]
        %v1868 = vld [vmem:[#allocation2 + $0x120] sm:$0xff]
        %v1869 = vld [vmem:[#allocation2 + $0x128] sm:$0xff]
        %v1870 = vld [vmem:[#allocation2 + $0x130] sm:$0xff]
        %v1871 = vld [vmem:[#allocation2 + $0x138] sm:$0xff]
        %v1872 = vld [vmem:[#allocation2 + $0x140] sm:$0xff]
        %v1873 = vld [vmem:[#allocation2 + $0x148] sm:$0xff]
        %v1874 = vld [vmem:[#allocation2 + $0x150] sm:$0xff]
        %v1875 = vld [vmem:[#allocation2 + $0x158] sm:$0xff]
        %v1876 = vld [vmem:[#allocation2 + $0x160] sm:$0xff]
        %v1877 = vld [vmem:[#allocation2 + $0x168] sm:$0xff]
        %v1878 = vld [vmem:[#allocation2 + $0x170] sm:$0xff]
        %v1879 = vld [vmem:[#allocation2 + $0x178] sm:$0xff]
        %v1880 = vld [vmem:[#allocation2 + $0x180] sm:$0xff]
        %v1881 = vld [vmem:[#allocation2 + $0x188] sm:$0xff]
        %v1882 = vld [vmem:[#allocation2 + $0x190] sm:$0xff]
        %v1883 = vld [vmem:[#allocation2 + $0x198] sm:$0xff]
        %v1884 = vld [vmem:[#allocation2 + $0x1a0] sm:$0xf]
        %v1885 = vld [vmem:[#allocation2 + $0x1a8] sm:$0xf]
        %v1886 = vld [vmem:[#allocation2 + $0x1b0] sm:$0xf]
        %v1887 = vld [vmem:[#allocation2 + $0x1b8] sm:$0xf]
        %vm1888 = vcmask 883712
        %v1890 = vsel %vm1888, %v1831, 0
        %v1893 = vsel %vm374, %v1884, 0
        %v1896 = vsel %vm374, %v1885, 0
        %v1899 = vsel %vm374, %v1886, 0
        %v1902 = vsel %vm374, %v1887, 0
        %1904 = vmatprep.subr.mxu0 0.0
        %1905 = vmatpush1.msra.mxu0 0.0
        %1906 = vmatprep.subr.mxu0 0.0
        %1907 = vmatpush1.msra.mxu0 0.0
        %1908 = vmatprep.subr.mxu0 %v1896
        %1909 = vmatpush1.msra.mxu0 %v1893
        %1910 = vmatprep.subr.mxu0 %v1881
        %1911 = vmatpush1.msra.mxu0 %v1880
        %1912 = vmatprep.subr.mxu0 %v1877
        %1913 = vmatpush1.msra.mxu0 %v1876
        %1914 = vmatprep.subr.mxu0 %v1873
        %1915 = vmatpush1.msra.mxu0 %v1872
        %1916 = vmatprep.subr.mxu0 %v1869
        %1917 = vmatpush1.msra.mxu0 %v1868
        %1918 = vmatprep.subr.mxu0 %v1865
        %1919 = vmatpush1.msra.mxu0 %v1864
        %1920 = vmatprep.subr.mxu0 %v1861
        %1921 = vmatpush1.msra.mxu0 %v1860
        %1922 = vmatprep.subr.mxu0 %v1857
        %1923 = vmatpush1.msra.mxu0 %v1856
        %1924 = vmatprep.subr.mxu0 %v1853
        %1925 = vmatpush1.msra.mxu0 %v1852
        %1926 = vmatprep.subr.mxu0 %v1849
        %1927 = vmatpush1.msra.mxu0 %v1848
        %1928 = vmatprep.subr.mxu0 %v1845
        %1929 = vmatpush1.msra.mxu0 %v1844
        %1930 = vmatprep.subr.mxu0 %v1841
        %1931 = vmatpush1.msra.mxu0 %v1840
        %1932 = vmatprep.subr.mxu0 %v1837
        %1933 = vmatpush1.msra.mxu0 %v1836
        %1934 = vmatprep.subr.mxu0 %v1833
        %1935 = vmatpush1.msra.mxu0 %v1832
        %1936 = vmatprep.subr.mxu0 0.0
        %1937 = vmatpush2.msra.mxu0 0.0
        %1938 = vmatprep.subr.mxu0 0.0
        %1939 = vmatpush2.msra.mxu0 0.0
        %1940 = vmatprep.subr.mxu0 0.0
        %1941 = vmatpush2.msra.mxu0 0.0
        %1942 = vmatprep.subr.mxu0 0.0
        %1943 = vmatpush2.msra.mxu0 0.0
        %1944 = vmatprep.subr.mxu0 0.0
        %1945 = vmatpush2.msra.mxu0 0.0
        %1946 = vmatprep.subr.mxu0 0.0
        %1947 = vmatpush2.msra.mxu0 0.0
        %1948 = vmatprep.subr.mxu0 0.0
        %1949 = vmatpush2.msra.mxu0 0.0
        %1950 = vmatprep.subr.mxu0 0.0
        %1951 = vmatpush2.msra.mxu0 0.0
        %1952 = vmatprep.subr.mxu0 0.0
        %1953 = vmatpush2.msra.mxu0 0.0
        %1954 = vmatprep.subr.mxu0 0.0
        %1955 = vmatpush2.msra.mxu0 0.0
        %1956 = vmatprep.subr.mxu0 0.0
        %1957 = vmatpush2.msra.mxu0 0.0
        %1958 = vmatprep.subr.mxu0 0.0
        %1959 = vmatpush2.msra.mxu0 0.0
        %1960 = vmatprep.subr.mxu0 0.0
        %1961 = vmatpush2.msra.mxu0 0.0
        %1962 = vmatprep.subr.mxu0 0.0
        %1963 = vmatpush2.msra.mxu0 0.0
        %1964 = vmatprep.subr.mxu0 0.0
        %1965 = vmatpush2.msra.mxu0 0.0
        %1966 = vmatprep.subr.mxu0 0.0
        %1967 = vmatpush2.msra.mxu0 0.0
        %1968 = vmatprep.mubr.f32.mxu0 0.0
        %1969 = vmatmul.mubr.f32.gmra.mxu0 %v1890
        %v1970 = vpop.f32.mrf.mxu0
        %v1971 = vadd.f32 0.0, %v1970
        %v1972 = vpop.f32.mrf.mxu0
        %v1973 = vadd.f32 0.0, %v1972
        %1974 = vdwg.mxu0
        %1975 = vmatprep.subr.mxu0 0.0
        %1976 = vmatpush1.msra.mxu0 0.0
        %1977 = vmatprep.subr.mxu0 0.0
        %1978 = vmatpush1.msra.mxu0 0.0
        %1979 = vmatprep.subr.mxu0 %v1902
        %1980 = vmatpush1.msra.mxu0 %v1899
        %1981 = vmatprep.subr.mxu0 %v1883
        %1982 = vmatpush1.msra.mxu0 %v1882
        %1983 = vmatprep.subr.mxu0 %v1879
        %1984 = vmatpush1.msra.mxu0 %v1878
        %1985 = vmatprep.subr.mxu0 %v1875
        %1986 = vmatpush1.msra.mxu0 %v1874
        %1987 = vmatprep.subr.mxu0 %v1871
        %1988 = vmatpush1.msra.mxu0 %v1870
        %1989 = vmatprep.subr.mxu0 %v1867
        %1990 = vmatpush1.msra.mxu0 %v1866
        %1991 = vmatprep.subr.mxu0 %v1863
        %1992 = vmatpush1.msra.mxu0 %v1862
        %1993 = vmatprep.subr.mxu0 %v1859
        %1994 = vmatpush1.msra.mxu0 %v1858
        %1995 = vmatprep.subr.mxu0 %v1855
        %1996 = vmatpush1.msra.mxu0 %v1854
        %1997 = vmatprep.subr.mxu0 %v1851
        %1998 = vmatpush1.msra.mxu0 %v1850
        %1999 = vmatprep.subr.mxu0 %v1847
        %2000 = vmatpush1.msra.mxu0 %v1846
        %2001 = vmatprep.subr.mxu0 %v1843
        %2002 = vmatpush1.msra.mxu0 %v1842
        %2003 = vmatprep.subr.mxu0 %v1839
        %2004 = vmatpush1.msra.mxu0 %v1838
        %2005 = vmatprep.subr.mxu0 %v1835
        %2006 = vmatpush1.msra.mxu0 %v1834
        %2007 = vmatprep.subr.mxu0 0.0
        %2008 = vmatpush2.msra.mxu0 0.0
        %2009 = vmatprep.subr.mxu0 0.0
        %2010 = vmatpush2.msra.mxu0 0.0
        %2011 = vmatprep.subr.mxu0 0.0
        %2012 = vmatpush2.msra.mxu0 0.0
        %2013 = vmatprep.subr.mxu0 0.0
        %2014 = vmatpush2.msra.mxu0 0.0
        %2015 = vmatprep.subr.mxu0 0.0
        %2016 = vmatpush2.msra.mxu0 0.0
        %2017 = vmatprep.subr.mxu0 0.0
        %2018 = vmatpush2.msra.mxu0 0.0
        %2019 = vmatprep.subr.mxu0 0.0
        %2020 = vmatpush2.msra.mxu0 0.0
        %2021 = vmatprep.subr.mxu0 0.0
        %2022 = vmatpush2.msra.mxu0 0.0
        %2023 = vmatprep.subr.mxu0 0.0
        %2024 = vmatpush2.msra.mxu0 0.0
        %2025 = vmatprep.subr.mxu0 0.0
        %2026 = vmatpush2.msra.mxu0 0.0
        %2027 = vmatprep.subr.mxu0 0.0
        %2028 = vmatpush2.msra.mxu0 0.0
        %2029 = vmatprep.subr.mxu0 0.0
        %2030 = vmatpush2.msra.mxu0 0.0
        %2031 = vmatprep.subr.mxu0 0.0
        %2032 = vmatpush2.msra.mxu0 0.0
        %2033 = vmatprep.subr.mxu0 0.0
        %2034 = vmatpush2.msra.mxu0 0.0
        %2035 = vmatprep.subr.mxu0 0.0
        %2036 = vmatpush2.msra.mxu0 0.0
        %2037 = vmatprep.subr.mxu0 0.0
        %2038 = vmatpush2.msra.mxu0 0.0
        %2039 = vmatprep.mubr.f32.mxu0 0.0
        %2040 = vmatmul.mubr.f32.gmra.mxu0 %v1890
        %v2041 = vpop.f32.mrf.mxu0
        %v2042 = vadd.f32 0.0, %v2041
        %v2043 = vpop.f32.mrf.mxu0
        %v2044 = vadd.f32 0.0, %v2043
        %2045 = vdwg.mxu0
        %v2046 = vadd.f32 %v1971, %v1973
        %v2047 = vadd.f32 %v2046, %v2042
        %v2048 = vadd.f32 %v2047, %v2044
        %2049 = vadd.xlane.f32.xlu0 %v2048
        %v2050 = vpop.xlane.xlu0 %2049
        %v2051 = vmul.f32 %v2050, 0.001953125
        %v2052 = vmul.f32 %v1971, %v1971
        %v2053 = vmul.f32 %v1973, %v1973
        %v2054 = vmul.f32 %v2042, %v2042
        %v2055 = vmul.f32 %v2044, %v2044
        %v2056 = vadd.f32 %v2052, %v2053
        %v2057 = vadd.f32 %v2056, %v2054
        %v2058 = vadd.f32 %v2057, %v2055
        %2059 = vadd.xlane.f32.xlu0 %v2058
        %v2060 = vpop.xlane.xlu0 %2059
        %v2061 = vmul.f32 %v2060, 0.001953125
        %v2062 = vmul.f32 %v2051, %v2051
        %v2063 = vsub.f32 %v2061, %v2062
        %v2064 = vmax.f32 %v2063, 0.0
        %v2065 = vsub.f32 %v1971, %v2051
        %v2066 = vsub.f32 %v1973, %v2051
        %v2067 = vsub.f32 %v2042, %v2051
        %v2068 = vsub.f32 %v2044, %v2051
        %v2069 = vadd.f32 %v2064, 1e-05
        %v2070 = vrsqrt.pop %v2069
        %v2071 = vmul.f32 %v2065, %v2070
        %v2072 = vmul.f32 %v2066, %v2070
        %v2073 = vmul.f32 %v2067, %v2070
        %v2074 = vmul.f32 %v2068, %v2070
        %v2075 = vmax.f32 %v2071, 0.0
        %v2076 = vmax.f32 %v2072, 0.0
        %v2077 = vmax.f32 %v2073, 0.0
        %v2078 = vmax.f32 %v2074, 0.0
        %2079 = vst [vmem:[%s232] sm:$0xff] %v2075
        %2080 = vst [vmem:[%s232 + $0x8] sm:$0xff] %v2076
        %2081 = vst [vmem:[%s232 + $0x10] sm:$0xff] %v2077
        %2082 = vst [vmem:[%s232 + $0x18] sm:$0xff] %v2078
        %s2083 = sand.u32 %s116, 1
        %s2084 = scalar_lea.sflag [#allocation5], %s2083
        %s2085 = sand.u32 %s116, 1
        %s2086 = smul.addr %s2085, 32
        %s2087 = scalar_lea.vmem [#allocation9], %s2086
        // Predicated region
        $region45: #{tpu_custom_call.1} parent=31 // pred_check
          %p2088 = pneg %p126
        $region46: #{tpu_custom_call.1} parent=31 // pred_check_branch
          %2090 = sbr.rel (%p2088) target = $region48
        $region47: #{tpu_custom_call.1} parent=31 // pred_region
          %s2092 = ssub.s32 512, 512
          %2093 = vsyncadd %s2084, %s2092
          %s2094 = smul.addr %s26, 4
          %s2095 = smul.addr %s25, 4
          %s2096 = sadd.s32 %s2094, %s2095
          %s2097 = smul.addr %s2096, 128
          %s2098 = scalar_lea.hbm %s3, %s2097
          %s2100 = sshll.u32 %s2087, 4
          %s2101 = int_to_ptr.vmem [resolvable:$true] %s2100
          %2103 = dma.vmem_to_hbm [thread:$0]  %s2101, 512, %s2098, %s2084
        $region48: #{tpu_custom_call.1} parent=31 // pred_fallthru
          _
      $region32: #{tpu_custom_call.1} parent=5 // pred_fallthru
        _
      %p2104 = scmp.le.s32.totalorder 2, %s16
      // Predicated region
      $region49: #{tpu_custom_call.1} parent=5 // pred_check
        %p2105 = pneg %p2104
      $region50: #{tpu_custom_call.1} parent=5 // pred_check_branch
        %2107 = sbr.rel (%p2105) target = $region52
      $region51: #{tpu_custom_call.1} parent=5 // pred_region
        %s2108 = ssub.s32 %s16, 2
        // Predicated region
        $region53: #{tpu_custom_call.1} parent=51 // pred_check
          %p2109 = pneg %p132
        $region54: #{tpu_custom_call.1} parent=51 // pred_check_branch
          %2111 = sbr.rel (%p2109) target = $region56
        $region55: #{tpu_custom_call.1} parent=51 // pred_region
          %s2112 = sand.u32 %s117, 1
          %s2113 = scalar_lea.sflag [#allocation5], %s2112
          %s2114 = sand.u32 %s117, 1
          %s2115 = smul.addr %s2114, 32
          %s2116 = scalar_lea.vmem [#allocation9], %s2115
          %2117 = dma.done %s2113, 512
        $region56: #{tpu_custom_call.1} parent=51 // pred_fallthru
          _
      $region52: #{tpu_custom_call.1} parent=5 // pred_fallthru
        _
    $region6: #{tpu_custom_call.1} parent=1 // loop_footer
      %s20 = sadd.s32 1, %s16
    $region7: #{tpu_custom_call.1} parent=1 // loop_footer_branch
      %15 = sbr.rel target = $region3
    $region8: #{tpu_custom_call.1} parent=1 // loop_exit
      _
    %2118 = vsyncpa [#allocation4], 1
    %s2119 = scalar_lea.sflag [#allocation4], 1
    %2120 = vsyncpa %s2119, 1
    %2121 = vsyncpa [#allocation7], 1
    %s2122 = scalar_lea.sflag [#allocation7], 1
    %2123 = vsyncpa %s2122, 1
    %2124 = vsyncpa [#allocation5], 1
    %s2125 = scalar_lea.sflag [#allocation5], 1
    %2126 = vsyncpa %s2125, 1

</llo_original>
